<compile_context>
chip_gen: v7x
topology: tpu7x:2x2x1
jax: 0.10.0
libtpu: 0.0.40
codegen_flags: <defaults>
</compile_context>

<pallas_src>
import math

import jax
import jax.numpy as jnp
from jax.experimental import pallas as pl
from jax.experimental.pallas import tpu as pltpu


def _gcnii_kernel(scalars_ref, adj_ref, x_ref, h0_ref, w_ref, out_ref, acc_ref):
    # scalars_ref : SMEM (2,)  [alpha, beta]   (runtime scalars, no recompile per lth)
    # adj_ref     : VMEM (TM, TK)  adjacency tile
    # x_ref       : VMEM (TK, D)   hidden-state tile
    # h0_ref      : VMEM (TM, D)   initial-residual row tile
    # w_ref       : VMEM (D, D)    weight matrix (single-buffered, grid-invariant)
    # out_ref     : VMEM (TM, D)   output row tile
    # acc_ref     : VMEM (TM, D)   f32 accumulator for A @ H
    k = pl.program_id(1)

    @pl.when(k == 0)
    def _init():
        acc_ref[...] = jnp.zeros_like(acc_ref)

    # Partial A @ H contraction on the MXU; f32 accumulation regardless of input dtype.
    acc_ref[...] += jnp.dot(adj_ref[...], x_ref[...],
                            preferred_element_type=jnp.float32)

    @pl.when(k == pl.num_programs(1) - 1)
    def _finalize():
        alpha = scalars_ref[0]
        beta = scalars_ref[1]
        h = acc_ref[...]
        # support = (1 - alpha) * (A @ H) + alpha * H0   (f32 VPU blend)
        support = (1.0 - alpha) * h + alpha * h0_ref[...].astype(jnp.float32)
        # support @ W in the weight dtype (bf16 MXU fast path if W is bf16),
        # accumulated in f32.
        sw = jnp.dot(support.astype(w_ref.dtype), w_ref[...],
                     preferred_element_type=jnp.float32)
        out_ref[...] = (beta * sw + (1.0 - beta) * support).astype(out_ref.dtype)


def _vmem_limit_bytes(tile_m, tile_k, d, itemsize):
    """Pipeline footprint with headroom, clamped to this chip's VMEM capacity."""
    double_buffered = 2 * (tile_m * tile_k      # adj tile
                           + tile_k * d         # H tile
                           + tile_m * d         # H0 row tile
                           + tile_m * d)        # output tile
    resident = d * d * itemsize + tile_m * d * 4     # single-buffered W + f32 acc
    total = double_buffered * itemsize + resident
    total = int(total * 1.25) + (4 << 20)            # compiler scratch headroom
    try:
        physical = pltpu.get_tpu_info().vmem_capacity_bytes
    except Exception:
        physical = 64 << 20                          # conservative: v7x per-TC VMEM
    ceiling = int(physical * 0.8)                    # ~80% of physical (51 MiB on v7x,
                                                     #  ~102 MiB on v5e/v6e)
    return max(32 << 20, min(total, ceiling))


def gcnii_forward(x, adj, h0, w, *, alpha, theta, lth, tile_m=512, tile_k=2048):
    """Pallas GCNII forward. x/h0: (N, D), adj: (N, N), w: (D, D)."""
    n, d = x.shape
    assert adj.shape == (n, n)
    assert h0.shape == (n, d)
    assert w.shape == (d, d)

    tile_m = min(tile_m, n)
    tile_k = min(tile_k, n)
    # Guarantee >= 2 row tiles so the "parallel" axis can shard across both
    # v7x TensorCores (losing this halves throughput on compute-visible parts).
    if n // tile_m < 2 and n % 2 == 0 and (n // 2) % 8 == 0:
        tile_m = n // 2

    assert n % tile_m == 0, "N must be divisible by tile_m"
    assert n % tile_k == 0, "N must be divisible by tile_k"
    assert d % 128 == 0, "feature dim must be lane-dense (multiple of 128)"
    assert tile_m % 8 == 0 and (tile_k % 128 == 0 or tile_k == n)

    # beta is a runtime scalar (depends on the layer index lth) -> pass via SMEM
    # so every layer of a deep GCNII stack reuses the same compiled kernel.
    beta = math.log(theta / float(lth) + 1.0)
    scalars = jnp.array([float(alpha), float(beta)], dtype=jnp.float32)

    grid = (n // tile_m, n // tile_k)
    itemsize = x.dtype.itemsize

    cost = pl.CostEstimate(
        flops=2 * n * n * d + 2 * n * d * d,
        transcendentals=0,
        bytes_accessed=(n * n * itemsize                      # adj, streamed once
                        + (n // tile_m) * n * d * itemsize    # H, re-streamed per row tile
                        + 2 * n * d * itemsize                # H0 + output
                        + d * d * itemsize),                  # W
    )

    return pl.pallas_call(
        _gcnii_kernel,
        out_shape=jax.ShapeDtypeStruct((n, d), x.dtype),
        grid_spec=pltpu.PrefetchScalarGridSpec(
            num_scalar_prefetch=0,
            grid=grid,
            in_specs=[
                pl.BlockSpec(memory_space=pltpu.MemorySpace.SMEM),    # [alpha, beta]
                pl.BlockSpec((tile_m, tile_k), lambda i, k: (i, k)),  # adj tile
                pl.BlockSpec((tile_k, d), lambda i, k: (k, 0)),       # H tile
                pl.BlockSpec((tile_m, d), lambda i, k: (i, 0)),       # H0 row tile
                # W never changes across the grid -> single buffer, save VMEM.
                pl.BlockSpec((d, d), lambda i, k: (0, 0),
                             pipeline_mode=pl.Buffered(1)),           # W (resident)
            ],
            out_specs=pl.BlockSpec((tile_m, d), lambda i, k: (i, 0)),
            scratch_shapes=[pltpu.VMEM((tile_m, d), jnp.float32)],
        ),
        compiler_params=pltpu.CompilerParams(
            dimension_semantics=("parallel", "arbitrary"),
            vmem_limit_bytes=_vmem_limit_bytes(tile_m, tile_k, d, itemsize),
        ),
        cost_estimate=cost,
    )(scalars, adj, x, h0, w)


def gcnii_reference(x, adj, h0, w, *, alpha, theta, lth):
    beta = math.log(theta / float(lth) + 1.0)
    h = adj @ x
    support = (1.0 - alpha) * h + alpha * h0
    return beta * (support @ w) + (1.0 - beta) * support


def _make_inputs(key, n, d):
    kx, ka, kh0, kw = jax.random.split(key, 4)
    x = jax.random.normal(kx, (n, d), dtype=jnp.float32)
    adj = jax.random.uniform(ka, (n, n), dtype=jnp.float32)
    adj = adj / jnp.sum(adj, axis=1, keepdims=True)   # row-normalized dense "Laplacian"
    h0 = jax.random.normal(kh0, (n, d), dtype=jnp.float32)
    # Xavier-uniform init for W (matches torch.nn.init.xavier_uniform_)
    bound = math.sqrt(6.0 / (d + d))
    w = jax.random.uniform(kw, (d, d), dtype=jnp.float32, minval=-bound, maxval=bound)
    return x, adj, h0, w


if __name__ == "__main__":
    alpha, theta = 0.1, 0.5
    key = jax.random.PRNGKey(0)

    # --- Test 1: f32, default (large) tiles; two layer depths reuse one compile.
    N, D = 512, 128
    x, adj, h0, w = _make_inputs(key, N, D)
    for layer_lth in (1.0, 3.0):
        out = jax.block_until_ready(
            gcnii_forward(x, adj, h0, w, alpha=alpha, theta=theta, lth=layer_lth))
        ref = gcnii_reference(x, adj, h0, w, alpha=alpha, theta=theta, lth=layer_lth)
        assert out.shape == (N, D)
        assert jnp.allclose(out, ref, atol=1e-4, rtol=1e-4), "f32 mismatch vs reference"

    # --- Test 2: f32, small tiles -> exercises the multi-step k accumulation path.
    N2, D2 = 256, 128
    x2, adj2, h02, w2 = _make_inputs(key, N2, D2)
    out2 = jax.block_until_ready(
        gcnii_forward(x2, adj2, h02, w2, alpha=alpha, theta=theta, lth=2.0,
                      tile_m=128, tile_k=128))
    ref2 = gcnii_reference(x2, adj2, h02, w2, alpha=alpha, theta=theta, lth=2.0)
    assert jnp.allclose(out2, ref2, atol=1e-4, rtol=1e-4), "k-tiled f32 mismatch"

    # --- Test 3: bf16 streaming path (halves the dominant N^2 adjacency HBM traffic).
    # Note: casting a row-normalized adjacency to bf16 means rows no longer sum
    # exactly to 1; covered by the looser tolerance below.
    out_bf16 = jax.block_until_ready(
        gcnii_forward(x.astype(jnp.bfloat16), adj.astype(jnp.bfloat16),
                      h0.astype(jnp.bfloat16), w.astype(jnp.bfloat16),
                      alpha=alpha, theta=theta, lth=3.0))
    ref = gcnii_reference(x, adj, h0, w, alpha=alpha, theta=theta, lth=3.0)
    assert out_bf16.dtype == jnp.bfloat16
    assert jnp.allclose(out_bf16.astype(jnp.float32), ref, atol=5e-2, rtol=5e-2), \
        "bf16 mismatch vs reference"

    print("KERNEL_OK")
</pallas_src>

<mosaic_0001>
module attributes {stable_mosaic.version = 11 : i64} {
  func.func @_gcnii_kernel(%arg0: i32, %arg1: i32, %arg2: memref<2xf32, #tpu.memory_space<smem>>, %arg3: memref<256x512xf32, #tpu.memory_space<vmem>>, %arg4: memref<512x128xf32, #tpu.memory_space<vmem>>, %arg5: memref<256x128xf32, #tpu.memory_space<vmem>>, %arg6: memref<128x128xf32, #tpu.memory_space<vmem>>, %arg7: memref<256x128xf32, #tpu.memory_space<vmem>>, %arg8: memref<256x128xf32, #tpu.memory_space<vmem>>) attributes {dimension_semantics = [#tpu.dimension_semantics<parallel>, #tpu.dimension_semantics<arbitrary>], iteration_bounds = array<i64: 2, 1>, scalar_prefetch = 0 : i64, scratch_operands = 1 : i64, tpu.core_type = #tpu.core_type<tc>, window_params = [{transform_indices = @transform_0, window_bounds = array<i64: 2>}, {transform_indices = @transform_1, window_bounds = array<i64: 256, 512>}, {transform_indices = @transform_2, window_bounds = array<i64: 512, 128>}, {transform_indices = @transform_3, window_bounds = array<i64: 256, 128>}, {pipeline_mode = #tpu.pipeline_mode<synchronous>, transform_indices = @transform_4, window_bounds = array<i64: 128, 128>}, {transform_indices = @transform_5, window_bounds = array<i64: 256, 128>}]} {
    %c0_i32 = arith.constant 0 : i32
    %0 = arith.cmpi eq, %arg1, %c0_i32 : i32
    %1 = arith.extui %0 : i1 to i32
    %c0_i32_0 = arith.constant 0 : i32
    %2 = arith.cmpi ne, %1, %c0_i32_0 : i32
    scf.if %2 {
      %cst_10 = arith.constant 0.000000e+00 : f32
      %12 = vector.broadcast %cst_10 : f32 to vector<256x128xf32>
      %c0_11 = arith.constant 0 : index
      %c0_12 = arith.constant 0 : index
      %13 = vector.load %arg8[%c0_11, %c0_12] : memref<256x128xf32, #tpu.memory_space<vmem>>, vector<256x128xf32>
      tpu.vector_store %arg8[%c0_11, %c0_12], %12 {strides = array<i32>} : memref<256x128xf32, #tpu.memory_space<vmem>>, vector<256x128xf32>,
    } else {
    }
    %c0 = arith.constant 0 : index
    %c0_1 = arith.constant 0 : index
    %3 = vector.load %arg8[%c0, %c0_1] : memref<256x128xf32, #tpu.memory_space<vmem>>, vector<256x128xf32>
    %c0_2 = arith.constant 0 : index
    %c0_3 = arith.constant 0 : index
    %4 = vector.load %arg3[%c0_2, %c0_3] : memref<256x512xf32, #tpu.memory_space<vmem>>, vector<256x512xf32>
    %c0_4 = arith.constant 0 : index
    %c0_5 = arith.constant 0 : index
    %5 = vector.load %arg4[%c0_4, %c0_5] : memref<512x128xf32, #tpu.memory_space<vmem>>, vector<512x128xf32>
    %cst = arith.constant dense<0.000000e+00> : vector<256x128xf32>
    %6 = tpu.matmul %4, %5, %cst {dimension_numbers = #tpu.dot_dimension_numbers<[1], [0], [0], [1], [0, 0, 1, 1], [], []>} : vector<256x512xf32>, vector<512x128xf32>, vector<256x128xf32> -> vector<256x128xf32>
    %7 = arith.addf %3, %6 : vector<256x128xf32>
    %c0_6 = arith.constant 0 : index
    %c0_7 = arith.constant 0 : index
    %8 = vector.load %arg8[%c0_6, %c0_7] : memref<256x128xf32, #tpu.memory_space<vmem>>, vector<256x128xf32>
    tpu.vector_store %arg8[%c0_6, %c0_7], %7 {strides = array<i32>} : memref<256x128xf32, #tpu.memory_space<vmem>>, vector<256x128xf32>,
    %c0_i32_8 = arith.constant 0 : i32
    %9 = arith.cmpi eq, %arg1, %c0_i32_8 : i32
    %10 = arith.extui %9 : i1 to i32
    %c0_i32_9 = arith.constant 0 : i32
    %11 = arith.cmpi ne, %10, %c0_i32_9 : i32
    scf.if %11 {
      %c0_10 = arith.constant 0 : index
      %12 = memref.load %arg2[%c0_10] : memref<2xf32, #tpu.memory_space<smem>>
      %c1 = arith.constant 1 : index
      %13 = memref.load %arg2[%c1] : memref<2xf32, #tpu.memory_space<smem>>
      %c0_11 = arith.constant 0 : index
      %c0_12 = arith.constant 0 : index
      %14 = vector.load %arg8[%c0_11, %c0_12] : memref<256x128xf32, #tpu.memory_space<vmem>>, vector<256x128xf32>
      %cst_13 = arith.constant 1.000000e+00 : f32
      %15 = arith.subf %cst_13, %12 : f32
      %16 = vector.broadcast %15 : f32 to vector<256x128xf32>
      %17 = arith.mulf %16, %14 : vector<256x128xf32>
      %c0_14 = arith.constant 0 : index
      %c0_15 = arith.constant 0 : index
      %18 = vector.load %arg5[%c0_14, %c0_15] : memref<256x128xf32, #tpu.memory_space<vmem>>, vector<256x128xf32>
      %19 = vector.broadcast %12 : f32 to vector<256x128xf32>
      %20 = arith.mulf %19, %18 : vector<256x128xf32>
      %21 = arith.addf %17, %20 : vector<256x128xf32>
      %c0_16 = arith.constant 0 : index
      %c0_17 = arith.constant 0 : index
      %22 = vector.load %arg6[%c0_16, %c0_17] : memref<128x128xf32, #tpu.memory_space<vmem>>, vector<128x128xf32>
      %cst_18 = arith.constant dense<0.000000e+00> : vector<256x128xf32>
      %23 = tpu.matmul %21, %22, %cst_18 {dimension_numbers = #tpu.dot_dimension_numbers<[1], [0], [0], [1], [0, 0, 1, 1], [], []>} : vector<256x128xf32>, vector<128x128xf32>, vector<256x128xf32> -> vector<256x128xf32>
      %24 = vector.broadcast %13 : f32 to vector<256x128xf32>
      %25 = arith.mulf %24, %23 : vector<256x128xf32>
      %cst_19 = arith.constant 1.000000e+00 : f32
      %26 = arith.subf %cst_19, %13 : f32
      %27 = vector.broadcast %26 : f32 to vector<256x128xf32>
      %28 = arith.mulf %27, %21 : vector<256x128xf32>
      %29 = arith.addf %25, %28 : vector<256x128xf32>
      %c0_20 = arith.constant 0 : index
      %c0_21 = arith.constant 0 : index
      %30 = vector.load %arg7[%c0_20, %c0_21] : memref<256x128xf32, #tpu.memory_space<vmem>>, vector<256x128xf32>
      tpu.vector_store %arg7[%c0_20, %c0_21], %29 {strides = array<i32>} : memref<256x128xf32, #tpu.memory_space<vmem>>, vector<256x128xf32>,
    } else {
    }
    return
  }
  func.func @transform_0(%arg0: i32, %arg1: i32) -> i32 {
    %c0_i32 = arith.constant 0 : i32
    %c0_i32_0 = arith.constant 0 : i32
    return %c0_i32 : i32
  }
  func.func @transform_1(%arg0: i32, %arg1: i32) -> (i32, i32) {
    %c0_i32 = arith.constant 0 : i32
    return %arg0, %arg1 : i32, i32
  }
  func.func @transform_2(%arg0: i32, %arg1: i32) -> (i32, i32) {
    %c0_i32 = arith.constant 0 : i32
    %c0_i32_0 = arith.constant 0 : i32
    return %arg1, %c0_i32 : i32, i32
  }
  func.func @transform_3(%arg0: i32, %arg1: i32) -> (i32, i32) {
    %c0_i32 = arith.constant 0 : i32
    %c0_i32_0 = arith.constant 0 : i32
    return %arg0, %c0_i32 : i32, i32
  }
  func.func @transform_4(%arg0: i32, %arg1: i32) -> (i32, i32) {
    %c0_i32 = arith.constant 0 : i32
    %c0_i32_0 = arith.constant 0 : i32
    %c0_i32_1 = arith.constant 0 : i32
    return %c0_i32, %c0_i32_0 : i32, i32
  }
  func.func @transform_5(%arg0: i32, %arg1: i32) -> (i32, i32) {
    %c0_i32 = arith.constant 0 : i32
    %c0_i32_0 = arith.constant 0 : i32
    return %arg0, %c0_i32 : i32, i32
  }
}

</mosaic_0001>

<llo_original>
// kernel: tpu_custom_call.1
$region0: #{tpu_custom_call.1}
  #allocation0 [shape = 'u32[]', space=smem, size = 0x4, offset = 0x4, fixed_abs, tag = 'smem constant byte address 0x4 - core index']
  #allocation1 [shape = 'u32[144,128]{1,0:T(1,128)}', space=vmem, size = 0x12000, scoped, tag = 'internal scratch']
  #allocation2 [shape = 'f32[256,128]{1,0:T(8,128)}', space=vmem, size = 0x20000, scoped, tag = 'scratch operand']
  %s0 = inlined_call_operand.hbm [shape: f32[2], index: 0, kind: input, shape index: {}]
  %s1 = inlined_call_operand.hbm [shape: f32[512,512], index: 1, kind: input, shape index: {}]
  %s2 = inlined_call_operand.hbm [shape: f32[512,128], index: 2, kind: input, shape index: {}]
  %s3 = inlined_call_operand.hbm [shape: f32[512,128], index: 3, kind: input, shape index: {}]
  %s4 = inlined_call_operand.hbm [shape: f32[128,128], index: 4, kind: input, shape index: {}]
  %s5 = inlined_call_operand.hbm [shape: f32[512,128], index: 5, kind: output, shape index: {}]
  %s6 = sld [smem:[#allocation0]]
  $region81: #{tpu_custom_call.1} parent=0
    _
  %s8 = ssub.s32 1, %s6
  %s9 = scalar_select 0, %s8, %s6
  $region1: #{tpu_custom_call.1} parent=0
    #allocation3 [shape = 'u8[512]{0}', space=smem, size = 0x200, scoped, tag = 'input window, operand 0, single buffered']
    #allocation4 [shape = 's32[2]{0}', space=sflag, size = 0x8, scoped, tag = 'scoped memory for tpu_custom_call.1']
    #allocation5 [shape = 's32[2]{0}', space=sflag, size = 0x8, scoped, tag = 'scoped memory for tpu_custom_call.1']
    #allocation6 [shape = 's32[2]{0}', space=sflag, size = 0x8, scoped, tag = 'scoped memory for tpu_custom_call.1']
    #allocation7 [shape = 'u8[1048576]{0}', space=vmem, size = 0x100000, scoped, tag = 'input window, operand 1']
    #allocation8 [shape = 'u8[262144]{0}', space=vmem, size = 0x40000, scoped, tag = 'input window, operand 2, single buffered']
    #allocation9 [shape = 's32[1]{0}', space=sflag, size = 0x4, scoped, tag = 'scoped memory for tpu_custom_call.1']
    #allocation10 [shape = 'u8[262144]{0}', space=vmem, size = 0x40000, scoped, tag = 'input window, operand 3']
    #allocation11 [shape = 'u8[65536]{0}', space=vmem, size = 0x10000, scoped, tag = 'input window, operand 4, single buffered']
    #allocation12 [shape = 'u8[262144]{0}', space=vmem, size = 0x40000, scoped, tag = 'output window, operand 0']
    %10 = vsyncpa [#allocation6], 0
    %11 = vsyncpa [#allocation4], 0
    %s12 = scalar_lea.sflag [#allocation4], 1
    %13 = vsyncpa %s12, 0
    %14 = vsyncpa [#allocation9], 0
    %15 = vsyncpa [#allocation5], 0
    %s16 = scalar_lea.sflag [#allocation5], 1
    %17 = vsyncpa %s16, 0
    loop: start=0, step=1, limit=4
    $region2: #{tpu_custom_call.1} parent=1 // loop_pre_header
      _
    $region3: #{tpu_custom_call.1} parent=1 // loop_header
      %s19 = sphi 0, %s23
      %p20 = scmp.ge.s32.totalorder %s19, 4
      %s26 = sphi 0, %s38
      %s27 = sphi 0, %s34
      %s28 = sphi 0, %s26
      %s29 = sphi 0, %s27
      %s30 = sphi 0, %s28
      %s31 = sphi 0, %s29
      %s39 = sphi 0, %s39
      %s41 = sphi 0, %s39
      %s42 = sphi 0, %s41
      %s56 = sphi 0, %s42
      %s64 = sphi 0, %s66
      %s67 = sphi 0, %s64
      %s68 = sphi 0, %s67
      %s84 = sphi 0, %s68
      %s90 = sphi 0, %s92
      %s93 = sphi 0, %s90
      %s94 = sphi 0, %s93
      %s110 = sphi 0, %s94
      %s116 = sphi 0, %s118
      %s119 = sphi 0, %s116
      %s120 = sphi 0, %s119
      %s136 = sphi 0, %s120
      %s140 = sphi 0, %s140
      %s142 = sphi 0, %s140
      %s143 = sphi 0, %s142
      %s157 = sphi 0, %s143
      %s163 = sphi 0, %s165
      %s166 = sphi 0, %s163
      %s167 = sphi 0, %s166
      %s183 = sphi 0, %s167
    $region4: #{tpu_custom_call.1} parent=1 // loop_header_branch
      %22 = sbr.rel (%p20) target = $region8
    $region5: #{tpu_custom_call.1} parent=1 // loop_body
      %s24 = ssub.s32 %s19, 1
      %s25 = ssub.s32 %s19, 2
      %s32 = sadd.s32 1, %s27
      %p33 = scmp.ge.s32.totalorder %s32, 1
      %s34 = scalar_select %p33, 0, %s32
      %s35 = sadd.s32 1, %s26
      %s36 = scalar_select %p33, %s35, %s26
      %p37 = scmp.ge.s32.totalorder %s36, 2
      %s38 = scalar_select %p37, 0, %s36
      %s40 = sadd.s32 %s39, 1
      %p43 = scmp.eq.s32.totalorder %s19, 1
      %p44 = scmp.ne.s32.totalorder %s39, %s41
      %p45 = scmp.eq.s32.totalorder %s19, 0
      %p46 = por %p44, %p45
      %p47 = scmp.ne.s32.totalorder %s39, %s41
      %p48 = scmp.eq.s32.totalorder %s24, 1
      %p49 = por %p47, %p48
      %p50 = scmp.ne.s32.totalorder %s41, %s42
      %p51 = scmp.eq.s32.totalorder %s24, 0
      %p52 = por %p50, %p51
      %p53 = scmp.ne.s32.totalorder %s41, %s42
      %p54 = scmp.eq.s32.totalorder %s25, 1
      %p55 = por %p53, %p54
      %p57 = scmp.ne.s32.totalorder %s42, %s56
      %p58 = scmp.eq.s32.totalorder %s25, 0
      %p59 = por %p57, %p58
      %s60 = ssub.s32 %s26, %s38
      %s61 = ssub.s32 %s27, %s34
      %s62 = sor.u32 %s60, %s61
      %p63 = scmp.eq.s32.totalorder %s62, 0
      %s65 = sadd.s32 %s64, 1
      %s66 = scalar_select %p63, %s64, %s65
      %p69 = pneg %p63
      %p70 = scmp.eq.s32.totalorder %s19, 1
      %p71 = por %p69, %p70
      %p72 = scmp.ne.s32.totalorder %s64, %s67
      %p73 = scmp.eq.s32.totalorder %s19, 0
      %p74 = por %p72, %p73
      %p75 = scmp.ne.s32.totalorder %s64, %s67
      %p76 = scmp.eq.s32.totalorder %s24, 1
      %p77 = por %p75, %p76
      %p78 = scmp.ne.s32.totalorder %s67, %s68
      %p79 = scmp.eq.s32.totalorder %s24, 0
      %p80 = por %p78, %p79
      %p81 = scmp.ne.s32.totalorder %s67, %s68
      %p82 = scmp.eq.s32.totalorder %s25, 1
      %p83 = por %p81, %p82
      %p85 = scmp.ne.s32.totalorder %s68, %s84
      %p86 = scmp.eq.s32.totalorder %s25, 0
      %p87 = por %p85, %p86
      %s88 = ssub.s32 %s27, %s34
      %p89 = scmp.eq.s32.totalorder %s88, 0
      %s91 = sadd.s32 %s90, 1
      %s92 = scalar_select %p89, %s90, %s91
      %p95 = pneg %p89
      %p96 = scmp.eq.s32.totalorder %s19, 1
      %p97 = por %p95, %p96
      %p98 = scmp.ne.s32.totalorder %s90, %s93
      %p99 = scmp.eq.s32.totalorder %s19, 0
      %p100 = por %p98, %p99
      %p101 = scmp.ne.s32.totalorder %s90, %s93
      %p102 = scmp.eq.s32.totalorder %s24, 1
      %p103 = por %p101, %p102
      %p104 = scmp.ne.s32.totalorder %s93, %s94
      %p105 = scmp.eq.s32.totalorder %s24, 0
      %p106 = por %p104, %p105
      %p107 = scmp.ne.s32.totalorder %s93, %s94
      %p108 = scmp.eq.s32.totalorder %s25, 1
      %p109 = por %p107, %p108
      %p111 = scmp.ne.s32.totalorder %s94, %s110
      %p112 = scmp.eq.s32.totalorder %s25, 0
      %p113 = por %p111, %p112
      %s114 = ssub.s32 %s26, %s38
      %p115 = scmp.eq.s32.totalorder %s114, 0
      %s117 = sadd.s32 %s116, 1
      %s118 = scalar_select %p115, %s116, %s117
      %p121 = pneg %p115
      %p122 = scmp.eq.s32.totalorder %s19, 1
      %p123 = por %p121, %p122
      %p124 = scmp.ne.s32.totalorder %s116, %s119
      %p125 = scmp.eq.s32.totalorder %s19, 0
      %p126 = por %p124, %p125
      %p127 = scmp.ne.s32.totalorder %s116, %s119
      %p128 = scmp.eq.s32.totalorder %s24, 1
      %p129 = por %p127, %p128
      %p130 = scmp.ne.s32.totalorder %s119, %s120
      %p131 = scmp.eq.s32.totalorder %s24, 0
      %p132 = por %p130, %p131
      %p133 = scmp.ne.s32.totalorder %s119, %s120
      %p134 = scmp.eq.s32.totalorder %s25, 1
      %p135 = por %p133, %p134
      %p137 = scmp.ne.s32.totalorder %s120, %s136
      %p138 = scmp.eq.s32.totalorder %s25, 0
      %p139 = por %p137, %p138
      %s141 = sadd.s32 %s140, 1
      %p144 = scmp.eq.s32.totalorder %s19, 1
      %p145 = scmp.ne.s32.totalorder %s140, %s142
      %p146 = scmp.eq.s32.totalorder %s19, 0
      %p147 = por %p145, %p146
      %p148 = scmp.ne.s32.totalorder %s140, %s142
      %p149 = scmp.eq.s32.totalorder %s24, 1
      %p150 = por %p148, %p149
      %p151 = scmp.ne.s32.totalorder %s142, %s143
      %p152 = scmp.eq.s32.totalorder %s24, 0
      %p153 = por %p151, %p152
      %p154 = scmp.ne.s32.totalorder %s142, %s143
      %p155 = scmp.eq.s32.totalorder %s25, 1
      %p156 = por %p154, %p155
      %p158 = scmp.ne.s32.totalorder %s143, %s157
      %p159 = scmp.eq.s32.totalorder %s25, 0
      %p160 = por %p158, %p159
      %s161 = ssub.s32 %s26, %s38
      %p162 = scmp.eq.s32.totalorder %s161, 0
      %s164 = sadd.s32 %s163, 1
      %s165 = scalar_select %p162, %s163, %s164
      %p168 = pneg %p162
      %p169 = scmp.eq.s32.totalorder %s19, 1
      %p170 = por %p168, %p169
      %p171 = scmp.ne.s32.totalorder %s163, %s166
      %p172 = scmp.eq.s32.totalorder %s19, 0
      %p173 = por %p171, %p172
      %p174 = scmp.ne.s32.totalorder %s163, %s166
      %p175 = scmp.eq.s32.totalorder %s24, 1
      %p176 = por %p174, %p175
      %p177 = scmp.ne.s32.totalorder %s166, %s167
      %p178 = scmp.eq.s32.totalorder %s24, 0
      %p179 = por %p177, %p178
      %p180 = scmp.ne.s32.totalorder %s166, %s167
      %p181 = scmp.eq.s32.totalorder %s25, 1
      %p182 = por %p180, %p181
      %p184 = scmp.ne.s32.totalorder %s167, %s183
      %p185 = scmp.eq.s32.totalorder %s25, 0
      %p186 = por %p184, %p185
      %p187 = scmp.le.s32.totalorder 1, %s19
      %p188 = scmp.lt.s32.totalorder %s19, 3
      %p189 = pnand %p187, %p188
      %p190 = pneg %p189
      // Predicated region
      $region9: #{tpu_custom_call.1} parent=5 // pred_check
        _
      $region10: #{tpu_custom_call.1} parent=5 // pred_check_branch
        %192 = sbr.rel (%p189) target = $region12
      $region11: #{tpu_custom_call.1} parent=5 // pred_region
        %s193 = ssub.s32 %s19, 1
        // Predicated region
        $region13: #{tpu_custom_call.1} parent=11 // pred_check
          %p194 = pneg %p52
        $region14: #{tpu_custom_call.1} parent=11 // pred_check_branch
          %196 = sbr.rel (%p194) target = $region16
        $region15: #{tpu_custom_call.1} parent=11 // pred_region
          %s198 = ssub.s32 16, 16
          %199 = vsyncadd [#allocation6], %s198
          %202 = dma.hbm_to_smem %s0, 16, [#allocation3], [#allocation6]
        $region16: #{tpu_custom_call.1} parent=11 // pred_fallthru
          _
        // Predicated region
        $region17: #{tpu_custom_call.1} parent=11 // pred_check
          %p203 = pneg %p106
        $region18: #{tpu_custom_call.1} parent=11 // pred_check_branch
          %205 = sbr.rel (%p203) target = $region20
        $region19: #{tpu_custom_call.1} parent=11 // pred_region
          %s206 = smul.u32 64, %s29
          %s208 = ssub.s32 8192, 8192
          %209 = vsyncadd [#allocation9], %s208
          %s210 = smul.addr %s206, 128
          %s211 = scalar_lea.hbm %s2, %s210
          %s212 = sshll.u32 [#allocation8], 4
          %s213 = int_to_ptr.vmem [resolvable:$true] %s212
          %218 = dma.hbm_to_vmem [thread:$0]  %s211, 8192, %s213, [#allocation9], 128, 128, 8
        $region20: #{tpu_custom_call.1} parent=11 // pred_fallthru
          _
        // Predicated region
        $region21: #{tpu_custom_call.1} parent=11 // pred_check
          %p219 = pneg %p153
        $region22: #{tpu_custom_call.1} parent=11 // pred_check_branch
          %221 = sbr.rel (%p219) target = $region24
        $region23: #{tpu_custom_call.1} parent=11 // pred_region
          %s223 = ssub.s32 2048, 2048
          %224 = vsyncadd [#allocation9], %s223
          %s225 = sshll.u32 [#allocation11], 4
          %s226 = int_to_ptr.vmem [resolvable:$true] %s225
          %231 = dma.hbm_to_vmem [thread:$0]  %s4, 2048, %s226, [#allocation9], 128, 128, 8
        $region24: #{tpu_custom_call.1} parent=11 // pred_fallthru
          _
      $region12: #{tpu_custom_call.1} parent=5 // pred_fallthru
        _
      %p232 = scmp.lt.s32.totalorder %s19, 2
      // Predicated region
      $region25: #{tpu_custom_call.1} parent=5 // pred_check
        %p233 = pneg %p232
      $region26: #{tpu_custom_call.1} parent=5 // pred_check_branch
        %235 = sbr.rel (%p233) target = $region28
      $region27: #{tpu_custom_call.1} parent=5 // pred_region
        // Predicated region
        $region29: #{tpu_custom_call.1} parent=27 // pred_check
          %p236 = pneg %p74
        $region30: #{tpu_custom_call.1} parent=27 // pred_check_branch
          %238 = sbr.rel (%p236) target = $region32
        $region31: #{tpu_custom_call.1} parent=27 // pred_region
          %s239 = sand.u32 %s19, 1
          %s240 = scalar_lea.sflag [#allocation4], %s239
          %s241 = sand.u32 %s64, 1
          %s242 = smul.addr %s241, 1024
          %s243 = scalar_lea.vmem [#allocation7], %s242
          %s244 = smul.u32 32, %s26
          %s245 = smul.u32 4, %s27
          %s247 = ssub.s32 16384, 16384
          %248 = vsyncadd %s240, %s247
          %s249 = smul.addr %s244, 4
          %s250 = sadd.s32 %s245, %s249
          %s251 = smul.addr %s250, 128
          %s252 = scalar_lea.hbm %s1, %s251
          %s253 = sshll.u32 %s243, 4
          %s254 = int_to_ptr.vmem [resolvable:$true] %s253
          %259 = dma.hbm_to_vmem [thread:$0]  %s252, 16384, %s254, %s240, 512, 512, 32
        $region32: #{tpu_custom_call.1} parent=27 // pred_fallthru
          _
        // Predicated region
        $region33: #{tpu_custom_call.1} parent=27 // pred_check
          %p260 = pneg %p126
        $region34: #{tpu_custom_call.1} parent=27 // pred_check_branch
          %262 = sbr.rel (%p260) target = $region36
        $region35: #{tpu_custom_call.1} parent=27 // pred_region
          %s263 = sand.u32 %s19, 1
          %s264 = scalar_lea.sflag [#allocation4], %s263
          %s265 = sand.u32 %s116, 1
          %s266 = smul.addr %s265, 256
          %s267 = scalar_lea.vmem [#allocation10], %s266
          %s268 = smul.u32 32, %s26
          %s270 = ssub.s32 4096, 4096
          %271 = vsyncadd %s264, %s270
          %s272 = smul.addr %s268, 128
          %s273 = scalar_lea.hbm %s3, %s272
          %s274 = sshll.u32 %s267, 4
          %s275 = int_to_ptr.vmem [resolvable:$true] %s274
          %280 = dma.hbm_to_vmem [thread:$0]  %s273, 4096, %s275, %s264, 128, 128, 8
        $region36: #{tpu_custom_call.1} parent=27 // pred_fallthru
          _
      $region28: #{tpu_custom_call.1} parent=5 // pred_fallthru
        _
      %p281 = scmp.le.s32.totalorder 1, %s19
      %p282 = scmp.lt.s32.totalorder %s19, 3
      %p283 = pnand %p281, %p282
      %p284 = pneg %p283
      // Predicated region
      $region37: #{tpu_custom_call.1} parent=5 // pred_check
        _
      $region38: #{tpu_custom_call.1} parent=5 // pred_check_branch
        %286 = sbr.rel (%p283) target = $region40
      $region39: #{tpu_custom_call.1} parent=5 // pred_region
        %s287 = ssub.s32 %s19, 1
        // Predicated region
        $region41: #{tpu_custom_call.1} parent=39 // pred_check
          %p288 = pneg %p52
        $region42: #{tpu_custom_call.1} parent=39 // pred_check_branch
          %290 = sbr.rel (%p288) target = $region44
        $region43: #{tpu_custom_call.1} parent=39 // pred_region
          %291 = dma.done [#allocation6], 16
        $region44: #{tpu_custom_call.1} parent=39 // pred_fallthru
          _
        %s292 = sand.u32 %s24, 1
        %s293 = scalar_lea.sflag [#allocation4], %s292
        %s294 = sand.u32 %s67, 1
        %s295 = smul.addr %s294, 1024
        %s296 = scalar_lea.vmem [#allocation7], %s295
        // Predicated region
        $region45: #{tpu_custom_call.1} parent=39 // pred_check
          %p297 = pneg %p80
        $region46: #{tpu_custom_call.1} parent=39 // pred_check_branch
          %299 = sbr.rel (%p297) target = $region48
        $region47: #{tpu_custom_call.1} parent=39 // pred_region
          %300 = dma.done %s293, 16384
        $region48: #{tpu_custom_call.1} parent=39 // pred_fallthru
          _
        // Predicated region
        $region49: #{tpu_custom_call.1} parent=39 // pred_check
          %p301 = pneg %p106
        $region50: #{tpu_custom_call.1} parent=39 // pred_check_branch
          %303 = sbr.rel (%p301) target = $region52
        $region51: #{tpu_custom_call.1} parent=39 // pred_region
          %304 = dma.done [#allocation9], 8192
        $region52: #{tpu_custom_call.1} parent=39 // pred_fallthru
          _
        %s305 = sand.u32 %s24, 1
        %s306 = scalar_lea.sflag [#allocation4], %s305
        %s307 = sand.u32 %s119, 1
        %s308 = smul.addr %s307, 256
        %s309 = scalar_lea.vmem [#allocation10], %s308
        // Predicated region
        $region53: #{tpu_custom_call.1} parent=39 // pred_check
          %p310 = pneg %p132
        $region54: #{tpu_custom_call.1} parent=39 // pred_check_branch
          %312 = sbr.rel (%p310) target = $region56
        $region55: #{tpu_custom_call.1} parent=39 // pred_region
          %313 = dma.done %s306, 4096
        $region56: #{tpu_custom_call.1} parent=39 // pred_fallthru
          _
        // Predicated region
        $region57: #{tpu_custom_call.1} parent=39 // pred_check
          %p314 = pneg %p153
        $region58: #{tpu_custom_call.1} parent=39 // pred_check_branch
          %316 = sbr.rel (%p314) target = $region60
        $region59: #{tpu_custom_call.1} parent=39 // pred_region
          %317 = dma.done [#allocation9], 2048
        $region60: #{tpu_custom_call.1} parent=39 // pred_fallthru
          _
        %318 = sfence
        %p319 = pneg %p52
        %p320 = pneg %p49
        %s321 = sand.u32 %s24, 1
        %s322 = scalar_lea.sflag [#allocation4], %s321
        %s323 = sand.u32 %s67, 1
        %s324 = smul.addr %s323, 1024
        %s325 = scalar_lea.vmem [#allocation7], %s324
        %p326 = pneg %p80
        %p327 = pneg %p77
        %p328 = pneg %p106
        %p329 = pneg %p103
        %s330 = sand.u32 %s24, 1
        %s331 = scalar_lea.sflag [#allocation4], %s330
        %s332 = sand.u32 %s119, 1
        %s333 = smul.addr %s332, 256
        %s334 = scalar_lea.vmem [#allocation10], %s333
        %p335 = pneg %p132
        %p336 = pneg %p129
        %p337 = pneg %p153
        %p338 = pneg %p150
        %p339 = pneg %p179
        %p340 = pneg %p176
        %s341 = sand.u32 %s166, 1
        %s342 = scalar_lea.sflag [#allocation5], %s341
        %s343 = sand.u32 %s166, 1
        %s344 = smul.addr %s343, 256
        %s345 = scalar_lea.vmem [#allocation12], %s344
        %s346 = smul.u32 32, %s28
        %s347 = smul.u32 4, %s29
        %s348 = smul.u32 64, %s29
        %s349 = smul.u32 32, %s28
        %s350 = smul.u32 32, %s28
        %p351 = scmp.eq.s32.totalorder %s29, 0
        // Predicated region
        $region61: #{tpu_custom_call.1} parent=39 // pred_check
          %p352 = pneg %p351
        $region62: #{tpu_custom_call.1} parent=39 // pred_check_branch
          %354 = sbr.rel (%p352) target = $region64
        $region63: #{tpu_custom_call.1} parent=39 // pred_region
          %355 = vst [vmem:[#allocation2] sm:$0xff] 0.0
          %356 = vst [vmem:[#allocation2 + $0x8] sm:$0xff] 0.0
          %357 = vst [vmem:[#allocation2 + $0x10] sm:$0xff] 0.0
          %358 = vst [vmem:[#allocation2 + $0x18] sm:$0xff] 0.0
          %359 = vst [vmem:[#allocation2 + $0x20] sm:$0xff] 0.0
          %360 = vst [vmem:[#allocation2 + $0x28] sm:$0xff] 0.0
          %361 = vst [vmem:[#allocation2 + $0x30] sm:$0xff] 0.0
          %362 = vst [vmem:[#allocation2 + $0x38] sm:$0xff] 0.0
          %363 = vst [vmem:[#allocation2 + $0x40] sm:$0xff] 0.0
          %364 = vst [vmem:[#allocation2 + $0x48] sm:$0xff] 0.0
          %365 = vst [vmem:[#allocation2 + $0x50] sm:$0xff] 0.0
          %366 = vst [vmem:[#allocation2 + $0x58] sm:$0xff] 0.0
          %367 = vst [vmem:[#allocation2 + $0x60] sm:$0xff] 0.0
          %368 = vst [vmem:[#allocation2 + $0x68] sm:$0xff] 0.0
          %369 = vst [vmem:[#allocation2 + $0x70] sm:$0xff] 0.0
          %370 = vst [vmem:[#allocation2 + $0x78] sm:$0xff] 0.0
          %371 = vst [vmem:[#allocation2 + $0x80] sm:$0xff] 0.0
          %372 = vst [vmem:[#allocation2 + $0x88] sm:$0xff] 0.0
          %373 = vst [vmem:[#allocation2 + $0x90] sm:$0xff] 0.0
          %374 = vst [vmem:[#allocation2 + $0x98] sm:$0xff] 0.0
          %375 = vst [vmem:[#allocation2 + $0xa0] sm:$0xff] 0.0
          %376 = vst [vmem:[#allocation2 + $0xa8] sm:$0xff] 0.0
          %377 = vst [vmem:[#allocation2 + $0xb0] sm:$0xff] 0.0
          %378 = vst [vmem:[#allocation2 + $0xb8] sm:$0xff] 0.0
          %379 = vst [vmem:[#allocation2 + $0xc0] sm:$0xff] 0.0
          %380 = vst [vmem:[#allocation2 + $0xc8] sm:$0xff] 0.0
          %381 = vst [vmem:[#allocation2 + $0xd0] sm:$0xff] 0.0
          %382 = vst [vmem:[#allocation2 + $0xd8] sm:$0xff] 0.0
          %383 = vst [vmem:[#allocation2 + $0xe0] sm:$0xff] 0.0
          %384 = vst [vmem:[#allocation2 + $0xe8] sm:$0xff] 0.0
          %385 = vst [vmem:[#allocation2 + $0xf0] sm:$0xff] 0.0
          %386 = vst [vmem:[#allocation2 + $0xf8] sm:$0xff] 0.0
        $region64: #{tpu_custom_call.1} parent=39 // pred_fallthru
          _
        %v387 = vld [vmem:[#allocation2] sm:$0xff]
        %v388 = vld [vmem:[#allocation2 + $0x8] sm:$0xff]
        %v389 = vld [vmem:[#allocation2 + $0x10] sm:$0xff]
        %v390 = vld [vmem:[#allocation2 + $0x18] sm:$0xff]
        %v391 = vld [vmem:[#allocation2 + $0x20] sm:$0xff]
        %v392 = vld [vmem:[#allocation2 + $0x28] sm:$0xff]
        %v393 = vld [vmem:[#allocation2 + $0x30] sm:$0xff]
        %v394 = vld [vmem:[#allocation2 + $0x38] sm:$0xff]
        %v395 = vld [vmem:[#allocation2 + $0x40] sm:$0xff]
        %v396 = vld [vmem:[#allocation2 + $0x48] sm:$0xff]
        %v397 = vld [vmem:[#allocation2 + $0x50] sm:$0xff]
        %v398 = vld [vmem:[#allocation2 + $0x58] sm:$0xff]
        %v399 = vld [vmem:[#allocation2 + $0x60] sm:$0xff]
        %v400 = vld [vmem:[#allocation2 + $0x68] sm:$0xff]
        %v401 = vld [vmem:[#allocation2 + $0x70] sm:$0xff]
        %v402 = vld [vmem:[#allocation2 + $0x78] sm:$0xff]
        %v403 = vld [vmem:[#allocation2 + $0x80] sm:$0xff]
        %v404 = vld [vmem:[#allocation2 + $0x88] sm:$0xff]
        %v405 = vld [vmem:[#allocation2 + $0x90] sm:$0xff]
        %v406 = vld [vmem:[#allocation2 + $0x98] sm:$0xff]
        %v407 = vld [vmem:[#allocation2 + $0xa0] sm:$0xff]
        %v408 = vld [vmem:[#allocation2 + $0xa8] sm:$0xff]
        %v409 = vld [vmem:[#allocation2 + $0xb0] sm:$0xff]
        %v410 = vld [vmem:[#allocation2 + $0xb8] sm:$0xff]
        %v411 = vld [vmem:[#allocation2 + $0xc0] sm:$0xff]
        %v412 = vld [vmem:[#allocation2 + $0xc8] sm:$0xff]
        %v413 = vld [vmem:[#allocation2 + $0xd0] sm:$0xff]
        %v414 = vld [vmem:[#allocation2 + $0xd8] sm:$0xff]
        %v415 = vld [vmem:[#allocation2 + $0xe0] sm:$0xff]
        %v416 = vld [vmem:[#allocation2 + $0xe8] sm:$0xff]
        %v417 = vld [vmem:[#allocation2 + $0xf0] sm:$0xff]
        %v418 = vld [vmem:[#allocation2 + $0xf8] sm:$0xff]
        %v419 = vld [vmem:[%s296] sm:$0xff]
        %v420 = vld [vmem:[%s296 + $0x8] sm:$0xff]
        %v421 = vld [vmem:[%s296 + $0x10] sm:$0xff]
        %v422 = vld [vmem:[%s296 + $0x18] sm:$0xff]
        %v423 = vld [vmem:[%s296 + $0x20] sm:$0xff]
        %v424 = vld [vmem:[%s296 + $0x28] sm:$0xff]
        %v425 = vld [vmem:[%s296 + $0x30] sm:$0xff]
        %v426 = vld [vmem:[%s296 + $0x38] sm:$0xff]
        %v427 = vld [vmem:[%s296 + $0x40] sm:$0xff]
        %v428 = vld [vmem:[%s296 + $0x48] sm:$0xff]
        %v429 = vld [vmem:[%s296 + $0x50] sm:$0xff]
        %v430 = vld [vmem:[%s296 + $0x58] sm:$0xff]
        %v431 = vld [vmem:[%s296 + $0x60] sm:$0xff]
        %v432 = vld [vmem:[%s296 + $0x68] sm:$0xff]
        %v433 = vld [vmem:[%s296 + $0x70] sm:$0xff]
        %v434 = vld [vmem:[%s296 + $0x78] sm:$0xff]
        %v435 = vld [vmem:[%s296 + $0x80] sm:$0xff]
        %v436 = vld [vmem:[%s296 + $0x88] sm:$0xff]
        %v437 = vld [vmem:[%s296 + $0x90] sm:$0xff]
        %v438 = vld [vmem:[%s296 + $0x98] sm:$0xff]
        %v439 = vld [vmem:[%s296 + $0xa0] sm:$0xff]
        %v440 = vld [vmem:[%s296 + $0xa8] sm:$0xff]
        %v441 = vld [vmem:[%s296 + $0xb0] sm:$0xff]
        %v442 = vld [vmem:[%s296 + $0xb8] sm:$0xff]
        %v443 = vld [vmem:[%s296 + $0xc0] sm:$0xff]
        %v444 = vld [vmem:[%s296 + $0xc8] sm:$0xff]
        %v445 = vld [vmem:[%s296 + $0xd0] sm:$0xff]
        %v446 = vld [vmem:[%s296 + $0xd8] sm:$0xff]
        %v447 = vld [vmem:[%s296 + $0xe0] sm:$0xff]
        %v448 = vld [vmem:[%s296 + $0xe8] sm:$0xff]
        %v449 = vld [vmem:[%s296 + $0xf0] sm:$0xff]
        %v450 = vld [vmem:[%s296 + $0xf8] sm:$0xff]
        %v451 = vld [vmem:[%s296 + $0x100] sm:$0xff]
        %v452 = vld [vmem:[%s296 + $0x108] sm:$0xff]
        %v453 = vld [vmem:[%s296 + $0x110] sm:$0xff]
        %v454 = vld [vmem:[%s296 + $0x118] sm:$0xff]
        %v455 = vld [vmem:[%s296 + $0x120] sm:$0xff]
        %v456 = vld [vmem:[%s296 + $0x128] sm:$0xff]
        %v457 = vld [vmem:[%s296 + $0x130] sm:$0xff]
        %v458 = vld [vmem:[%s296 + $0x138] sm:$0xff]
        %v459 = vld [vmem:[%s296 + $0x140] sm:$0xff]
        %v460 = vld [vmem:[%s296 + $0x148] sm:$0xff]
        %v461 = vld [vmem:[%s296 + $0x150] sm:$0xff]
        %v462 = vld [vmem:[%s296 + $0x158] sm:$0xff]
        %v463 = vld [vmem:[%s296 + $0x160] sm:$0xff]
        %v464 = vld [vmem:[%s296 + $0x168] sm:$0xff]
        %v465 = vld [vmem:[%s296 + $0x170] sm:$0xff]
        %v466 = vld [vmem:[%s296 + $0x178] sm:$0xff]
        %v467 = vld [vmem:[%s296 + $0x180] sm:$0xff]
        %v468 = vld [vmem:[%s296 + $0x188] sm:$0xff]
        %v469 = vld [vmem:[%s296 + $0x190] sm:$0xff]
        %v470 = vld [vmem:[%s296 + $0x198] sm:$0xff]
        %v471 = vld [vmem:[%s296 + $0x1a0] sm:$0xff]
        %v472 = vld [vmem:[%s296 + $0x1a8] sm:$0xff]
        %v473 = vld [vmem:[%s296 + $0x1b0] sm:$0xff]
        %v474 = vld [vmem:[%s296 + $0x1b8] sm:$0xff]
        %v475 = vld [vmem:[%s296 + $0x1c0] sm:$0xff]
        %v476 = vld [vmem:[%s296 + $0x1c8] sm:$0xff]
        %v477 = vld [vmem:[%s296 + $0x1d0] sm:$0xff]
        %v478 = vld [vmem:[%s296 + $0x1d8] sm:$0xff]
        %v479 = vld [vmem:[%s296 + $0x1e0] sm:$0xff]
        %v480 = vld [vmem:[%s296 + $0x1e8] sm:$0xff]
        %v481 = vld [vmem:[%s296 + $0x1f0] sm:$0xff]
        %v482 = vld [vmem:[%s296 + $0x1f8] sm:$0xff]
        %v483 = vld [vmem:[%s296 + $0x200] sm:$0xff]
        %v484 = vld [vmem:[%s296 + $0x208] sm:$0xff]
        %v485 = vld [vmem:[%s296 + $0x210] sm:$0xff]
        %v486 = vld [vmem:[%s296 + $0x218] sm:$0xff]
        %v487 = vld [vmem:[%s296 + $0x220] sm:$0xff]
        %v488 = vld [vmem:[%s296 + $0x228] sm:$0xff]
        %v489 = vld [vmem:[%s296 + $0x230] sm:$0xff]
        %v490 = vld [vmem:[%s296 + $0x238] sm:$0xff]
        %v491 = vld [vmem:[%s296 + $0x240] sm:$0xff]
        %v492 = vld [vmem:[%s296 + $0x248] sm:$0xff]
        %v493 = vld [vmem:[%s296 + $0x250] sm:$0xff]
        %v494 = vld [vmem:[%s296 + $0x258] sm:$0xff]
        %v495 = vld [vmem:[%s296 + $0x260] sm:$0xff]
        %v496 = vld [vmem:[%s296 + $0x268] sm:$0xff]
        %v497 = vld [vmem:[%s296 + $0x270] sm:$0xff]
        %v498 = vld [vmem:[%s296 + $0x278] sm:$0xff]
        %v499 = vld [vmem:[%s296 + $0x280] sm:$0xff]
        %v500 = vld [vmem:[%s296 + $0x288] sm:$0xff]
        %v501 = vld [vmem:[%s296 + $0x290] sm:$0xff]
        %v502 = vld [vmem:[%s296 + $0x298] sm:$0xff]
        %v503 = vld [vmem:[%s296 + $0x2a0] sm:$0xff]
        %v504 = vld [vmem:[%s296 + $0x2a8] sm:$0xff]
        %v505 = vld [vmem:[%s296 + $0x2b0] sm:$0xff]
        %v506 = vld [vmem:[%s296 + $0x2b8] sm:$0xff]
        %v507 = vld [vmem:[%s296 + $0x2c0] sm:$0xff]
        %v508 = vld [vmem:[%s296 + $0x2c8] sm:$0xff]
        %v509 = vld [vmem:[%s296 + $0x2d0] sm:$0xff]
        %v510 = vld [vmem:[%s296 + $0x2d8] sm:$0xff]
        %v511 = vld [vmem:[%s296 + $0x2e0] sm:$0xff]
        %v512 = vld [vmem:[%s296 + $0x2e8] sm:$0xff]
        %v513 = vld [vmem:[%s296 + $0x2f0] sm:$0xff]
        %v514 = vld [vmem:[%s296 + $0x2f8] sm:$0xff]
        %v515 = vld [vmem:[%s296 + $0x300] sm:$0xff]
        %v516 = vld [vmem:[%s296 + $0x308] sm:$0xff]
        %v517 = vld [vmem:[%s296 + $0x310] sm:$0xff]
        %v518 = vld [vmem:[%s296 + $0x318] sm:$0xff]
        %v519 = vld [vmem:[%s296 + $0x320] sm:$0xff]
        %v520 = vld [vmem:[%s296 + $0x328] sm:$0xff]
        %v521 = vld [vmem:[%s296 + $0x330] sm:$0xff]
        %v522 = vld [vmem:[%s296 + $0x338] sm:$0xff]
        %v523 = vld [vmem:[%s296 + $0x340] sm:$0xff]
        %v524 = vld [vmem:[%s296 + $0x348] sm:$0xff]
        %v525 = vld [vmem:[%s296 + $0x350] sm:$0xff]
        %v526 = vld [vmem:[%s296 + $0x358] sm:$0xff]
        %v527 = vld [vmem:[%s296 + $0x360] sm:$0xff]
        %v528 = vld [vmem:[%s296 + $0x368] sm:$0xff]
        %v529 = vld [vmem:[%s296 + $0x370] sm:$0xff]
        %v530 = vld [vmem:[%s296 + $0x378] sm:$0xff]
        %v531 = vld [vmem:[%s296 + $0x380] sm:$0xff]
        %v532 = vld [vmem:[%s296 + $0x388] sm:$0xff]
        %v533 = vld [vmem:[%s296 + $0x390] sm:$0xff]
        %v534 = vld [vmem:[%s296 + $0x398] sm:$0xff]
        %v535 = vld [vmem:[%s296 + $0x3a0] sm:$0xff]
        %v536 = vld [vmem:[%s296 + $0x3a8] sm:$0xff]
        %v537 = vld [vmem:[%s296 + $0x3b0] sm:$0xff]
        %v538 = vld [vmem:[%s296 + $0x3b8] sm:$0xff]
        %v539 = vld [vmem:[%s296 + $0x3c0] sm:$0xff]
        %v540 = vld [vmem:[%s296 + $0x3c8] sm:$0xff]
        %v541 = vld [vmem:[%s296 + $0x3d0] sm:$0xff]
        %v542 = vld [vmem:[%s296 + $0x3d8] sm:$0xff]
        %v543 = vld [vmem:[%s296 + $0x3e0] sm:$0xff]
        %v544 = vld [vmem:[%s296 + $0x3e8] sm:$0xff]
        %v545 = vld [vmem:[%s296 + $0x3f0] sm:$0xff]
        %v546 = vld [vmem:[%s296 + $0x3f8] sm:$0xff]
        %v547 = vld [vmem:[#allocation8] sm:$0xff]
        %v548 = vld [vmem:[#allocation8 + $0x8] sm:$0xff]
        %v549 = vld [vmem:[#allocation8 + $0x10] sm:$0xff]
        %v550 = vld [vmem:[#allocation8 + $0x18] sm:$0xff]
        %v551 = vld [vmem:[#allocation8 + $0x20] sm:$0xff]
        %v552 = vld [vmem:[#allocation8 + $0x28] sm:$0xff]
        %v553 = vld [vmem:[#allocation8 + $0x30] sm:$0xff]
        %v554 = vld [vmem:[#allocation8 + $0x38] sm:$0xff]
        %v555 = vld [vmem:[#allocation8 + $0x40] sm:$0xff]
        %v556 = vld [vmem:[#allocation8 + $0x48] sm:$0xff]
        %v557 = vld [vmem:[#allocation8 + $0x50] sm:$0xff]
        %v558 = vld [vmem:[#allocation8 + $0x58] sm:$0xff]
        %v559 = vld [vmem:[#allocation8 + $0x60] sm:$0xff]
        %v560 = vld [vmem:[#allocation8 + $0x68] sm:$0xff]
        %v561 = vld [vmem:[#allocation8 + $0x70] sm:$0xff]
        %v562 = vld [vmem:[#allocation8 + $0x78] sm:$0xff]
        %v563 = vld [vmem:[#allocation8 + $0x80] sm:$0xff]
        %v564 = vld [vmem:[#allocation8 + $0x88] sm:$0xff]
        %v565 = vld [vmem:[#allocation8 + $0x90] sm:$0xff]
        %v566 = vld [vmem:[#allocation8 + $0x98] sm:$0xff]
        %v567 = vld [vmem:[#allocation8 + $0xa0] sm:$0xff]
        %v568 = vld [vmem:[#allocation8 + $0xa8] sm:$0xff]
        %v569 = vld [vmem:[#allocation8 + $0xb0] sm:$0xff]
        %v570 = vld [vmem:[#allocation8 + $0xb8] sm:$0xff]
        %v571 = vld [vmem:[#allocation8 + $0xc0] sm:$0xff]
        %v572 = vld [vmem:[#allocation8 + $0xc8] sm:$0xff]
        %v573 = vld [vmem:[#allocation8 + $0xd0] sm:$0xff]
        %v574 = vld [vmem:[#allocation8 + $0xd8] sm:$0xff]
        %v575 = vld [vmem:[#allocation8 + $0xe0] sm:$0xff]
        %v576 = vld [vmem:[#allocation8 + $0xe8] sm:$0xff]
        %v577 = vld [vmem:[#allocation8 + $0xf0] sm:$0xff]
        %v578 = vld [vmem:[#allocation8 + $0xf8] sm:$0xff]
        %v579 = vld [vmem:[#allocation8 + $0x100] sm:$0xff]
        %v580 = vld [vmem:[#allocation8 + $0x108] sm:$0xff]
        %v581 = vld [vmem:[#allocation8 + $0x110] sm:$0xff]
        %v582 = vld [vmem:[#allocation8 + $0x118] sm:$0xff]
        %v583 = vld [vmem:[#allocation8 + $0x120] sm:$0xff]
        %v584 = vld [vmem:[#allocation8 + $0x128] sm:$0xff]
        %v585 = vld [vmem:[#allocation8 + $0x130] sm:$0xff]
        %v586 = vld [vmem:[#allocation8 + $0x138] sm:$0xff]
        %v587 = vld [vmem:[#allocation8 + $0x140] sm:$0xff]
        %v588 = vld [vmem:[#allocation8 + $0x148] sm:$0xff]
        %v589 = vld [vmem:[#allocation8 + $0x150] sm:$0xff]
        %v590 = vld [vmem:[#allocation8 + $0x158] sm:$0xff]
        %v591 = vld [vmem:[#allocation8 + $0x160] sm:$0xff]
        %v592 = vld [vmem:[#allocation8 + $0x168] sm:$0xff]
        %v593 = vld [vmem:[#allocation8 + $0x170] sm:$0xff]
        %v594 = vld [vmem:[#allocation8 + $0x178] sm:$0xff]
        %v595 = vld [vmem:[#allocation8 + $0x180] sm:$0xff]
        %v596 = vld [vmem:[#allocation8 + $0x188] sm:$0xff]
        %v597 = vld [vmem:[#allocation8 + $0x190] sm:$0xff]
        %v598 = vld [vmem:[#allocation8 + $0x198] sm:$0xff]
        %v599 = vld [vmem:[#allocation8 + $0x1a0] sm:$0xff]
        %v600 = vld [vmem:[#allocation8 + $0x1a8] sm:$0xff]
        %v601 = vld [vmem:[#allocation8 + $0x1b0] sm:$0xff]
        %v602 = vld [vmem:[#allocation8 + $0x1b8] sm:$0xff]
        %v603 = vld [vmem:[#allocation8 + $0x1c0] sm:$0xff]
        %v604 = vld [vmem:[#allocation8 + $0x1c8] sm:$0xff]
        %v605 = vld [vmem:[#allocation8 + $0x1d0] sm:$0xff]
        %v606 = vld [vmem:[#allocation8 + $0x1d8] sm:$0xff]
        %v607 = vld [vmem:[#allocation8 + $0x1e0] sm:$0xff]
        %v608 = vld [vmem:[#allocation8 + $0x1e8] sm:$0xff]
        %v609 = vld [vmem:[#allocation8 + $0x1f0] sm:$0xff]
        %v610 = vld [vmem:[#allocation8 + $0x1f8] sm:$0xff]
        %611 = vmatprep.subr.mxu0 0.0
        %612 = vmatpush1.msra.mxu0 %v547
        %613 = vmatprep.subr.mxu0 0.0
        %614 = vmatpush1.msra.mxu0 %v548
        %615 = vmatprep.subr.mxu0 0.0
        %616 = vmatpush1.msra.mxu0 %v549
        %617 = vmatprep.subr.mxu0 0.0
        %618 = vmatpush1.msra.mxu0 %v550
        %619 = vmatprep.subr.mxu0 0.0
        %620 = vmatpush1.msra.mxu0 %v551
        %621 = vmatprep.subr.mxu0 0.0
        %622 = vmatpush1.msra.mxu0 %v552
        %623 = vmatprep.subr.mxu0 0.0
        %624 = vmatpush1.msra.mxu0 %v553
        %625 = vmatprep.subr.mxu0 0.0
        %626 = vmatpush1.msra.mxu0 %v554
        %627 = vmatprep.subr.mxu0 0.0
        %628 = vmatpush1.msra.mxu0 %v555
        %629 = vmatprep.subr.mxu0 0.0
        %630 = vmatpush1.msra.mxu0 %v556
        %631 = vmatprep.subr.mxu0 0.0
        %632 = vmatpush1.msra.mxu0 %v557
        %633 = vmatprep.subr.mxu0 0.0
        %634 = vmatpush1.msra.mxu0 %v558
        %635 = vmatprep.subr.mxu0 0.0
        %636 = vmatpush1.msra.mxu0 %v559
        %637 = vmatprep.subr.mxu0 0.0
        %638 = vmatpush1.msra.mxu0 %v560
        %639 = vmatprep.subr.mxu0 0.0
        %640 = vmatpush1.msra.mxu0 %v561
        %641 = vmatprep.subr.mxu0 0.0
        %642 = vmatpush1.msra.mxu0 %v562
        %643 = vmatprep.subr.mxu0 0.0
        %644 = vmatpush1.msra.mxu0 %v563
        %645 = vmatprep.subr.mxu0 0.0
        %646 = vmatpush1.msra.mxu0 %v564
        %647 = vmatprep.subr.mxu0 0.0
        %648 = vmatpush1.msra.mxu0 %v565
        %649 = vmatprep.subr.mxu0 0.0
        %650 = vmatpush1.msra.mxu0 %v566
        %651 = vmatprep.subr.mxu0 0.0
        %652 = vmatpush1.msra.mxu0 %v567
        %653 = vmatprep.subr.mxu0 0.0
        %654 = vmatpush1.msra.mxu0 %v568
        %655 = vmatprep.subr.mxu0 0.0
        %656 = vmatpush1.msra.mxu0 %v569
        %657 = vmatprep.subr.mxu0 0.0
        %658 = vmatpush1.msra.mxu0 %v570
        %659 = vmatprep.subr.mxu0 0.0
        %660 = vmatpush1.msra.mxu0 %v571
        %661 = vmatprep.subr.mxu0 0.0
        %662 = vmatpush1.msra.mxu0 %v572
        %663 = vmatprep.subr.mxu0 0.0
        %664 = vmatpush1.msra.mxu0 %v573
        %665 = vmatprep.subr.mxu0 0.0
        %666 = vmatpush1.msra.mxu0 %v574
        %667 = vmatprep.subr.mxu0 0.0
        %668 = vmatpush1.msra.mxu0 %v575
        %669 = vmatprep.subr.mxu0 0.0
        %670 = vmatpush1.msra.mxu0 %v576
        %671 = vmatprep.subr.mxu0 0.0
        %672 = vmatpush1.msra.mxu0 %v577
        %673 = vmatprep.subr.mxu0 0.0
        %674 = vmatpush1.msra.mxu0 %v578
        %675 = vmatprep.mubr.f32.mxu0 %v420
        %676 = vmatmul.mubr.f32.gmra.mrb[0].mxu0 %v419
        %v677 = vpop.f32.mrb[0].mxu0
        %v678 = vadd.f32 0.0, %v677
        %v679 = vpop.f32.mrb[0].mxu0
        %680 = vmatprep.mubr.f32.mxu0 %v424
        %681 = vmatmul.mubr.f32.gmra.mrb[0].mxu0 %v423
        %v682 = vpop.f32.mrb[0].mxu0
        %v683 = vadd.f32 0.0, %v682
        %v684 = vpop.f32.mrb[0].mxu0
        %685 = vmatprep.mubr.f32.mxu0 %v428
        %686 = vmatmul.mubr.f32.gmra.mrb[0].mxu0 %v427
        %v687 = vpop.f32.mrb[0].mxu0
        %v688 = vadd.f32 0.0, %v687
        %v689 = vpop.f32.mrb[0].mxu0
        %690 = vmatprep.mubr.f32.mxu0 %v432
        %691 = vmatmul.mubr.f32.gmra.mrb[0].mxu0 %v431
        %v692 = vpop.f32.mrb[0].mxu0
        %v693 = vadd.f32 0.0, %v692
        %v694 = vpop.f32.mrb[0].mxu0
        %695 = vmatprep.mubr.f32.mxu0 %v436
        %696 = vmatmul.mubr.f32.gmra.mrb[0].mxu0 %v435
        %v697 = vpop.f32.mrb[0].mxu0
        %v698 = vadd.f32 0.0, %v697
        %v699 = vpop.f32.mrb[0].mxu0
        %700 = vmatprep.mubr.f32.mxu0 %v440
        %701 = vmatmul.mubr.f32.gmra.mrb[0].mxu0 %v439
        %v702 = vpop.f32.mrb[0].mxu0
        %v703 = vadd.f32 0.0, %v702
        %v704 = vpop.f32.mrb[0].mxu0
        %705 = vmatprep.mubr.f32.mxu0 %v444
        %706 = vmatmul.mubr.f32.gmra.mrb[0].mxu0 %v443
        %v707 = vpop.f32.mrb[0].mxu0
        %v708 = vadd.f32 0.0, %v707
        %v709 = vpop.f32.mrb[0].mxu0
        %710 = vmatprep.mubr.f32.mxu0 %v448
        %711 = vmatmul.mubr.f32.gmra.mrb[0].mxu0 %v447
        %v712 = vpop.f32.mrb[0].mxu0
        %v713 = vadd.f32 0.0, %v712
        %v714 = vpop.f32.mrb[0].mxu0
        %715 = vmatprep.mubr.f32.mxu0 %v452
        %716 = vmatmul.mubr.f32.gmra.mrb[0].mxu0 %v451
        %v717 = vpop.f32.mrb[0].mxu0
        %v718 = vadd.f32 0.0, %v717
        %v719 = vpop.f32.mrb[0].mxu0
        %720 = vmatprep.mubr.f32.mxu0 %v456
        %721 = vmatmul.mubr.f32.gmra.mrb[0].mxu0 %v455
        %v722 = vpop.f32.mrb[0].mxu0
        %v723 = vadd.f32 0.0, %v722
        %v724 = vpop.f32.mrb[0].mxu0
        %725 = vmatprep.mubr.f32.mxu0 %v460
        %726 = vmatmul.mubr.f32.gmra.mrb[0].mxu0 %v459
        %v727 = vpop.f32.mrb[0].mxu0
        %v728 = vadd.f32 0.0, %v727
        %v729 = vpop.f32.mrb[0].mxu0
        %730 = vmatprep.mubr.f32.mxu0 %v464
        %731 = vmatmul.mubr.f32.gmra.mrb[0].mxu0 %v463
        %v732 = vpop.f32.mrb[0].mxu0
        %v733 = vadd.f32 0.0, %v732
        %v734 = vpop.f32.mrb[0].mxu0
        %735 = vmatprep.mubr.f32.mxu0 %v468
        %736 = vmatmul.mubr.f32.gmra.mrb[0].mxu0 %v467
        %v737 = vpop.f32.mrb[0].mxu0
        %v738 = vadd.f32 0.0, %v737
        %v739 = vpop.f32.mrb[0].mxu0
        %740 = vmatprep.mubr.f32.mxu0 %v472
        %741 = vmatmul.mubr.f32.gmra.mrb[0].mxu0 %v471
        %v742 = vpop.f32.mrb[0].mxu0
        %v743 = vadd.f32 0.0, %v742
        %v744 = vpop.f32.mrb[0].mxu0
        %745 = vmatprep.mubr.f32.mxu0 %v476
        %746 = vmatmul.mubr.f32.gmra.mrb[0].mxu0 %v475
        %v747 = vpop.f32.mrb[0].mxu0
        %v748 = vadd.f32 0.0, %v747
        %v749 = vpop.f32.mrb[0].mxu0
        %750 = vmatprep.mubr.f32.mxu0 %v480
        %751 = vmatmul.mubr.f32.gmra.mrb[0].mxu0 %v479
        %v752 = vpop.f32.mrb[0].mxu0
        %v753 = vadd.f32 0.0, %v752
        %v754 = vpop.f32.mrb[0].mxu0
        %755 = vmatprep.mubr.f32.mxu0 %v484
        %756 = vmatmul.mubr.f32.gmra.mrb[0].mxu0 %v483
        %v757 = vpop.f32.mrb[0].mxu0
        %v758 = vadd.f32 0.0, %v757
        %v759 = vpop.f32.mrb[0].mxu0
        %760 = vmatprep.mubr.f32.mxu0 %v488
        %761 = vmatmul.mubr.f32.gmra.mrb[0].mxu0 %v487
        %v762 = vpop.f32.mrb[0].mxu0
        %v763 = vadd.f32 0.0, %v762
        %v764 = vpop.f32.mrb[0].mxu0
        %765 = vmatprep.mubr.f32.mxu0 %v492
        %766 = vmatmul.mubr.f32.gmra.mrb[0].mxu0 %v491
        %v767 = vpop.f32.mrb[0].mxu0
        %v768 = vadd.f32 0.0, %v767
        %v769 = vpop.f32.mrb[0].mxu0
        %770 = vmatprep.mubr.f32.mxu0 %v496
        %771 = vmatmul.mubr.f32.gmra.mrb[0].mxu0 %v495
        %v772 = vpop.f32.mrb[0].mxu0
        %v773 = vadd.f32 0.0, %v772
        %v774 = vpop.f32.mrb[0].mxu0
        %775 = vmatprep.mubr.f32.mxu0 %v500
        %776 = vmatmul.mubr.f32.gmra.mrb[0].mxu0 %v499
        %v777 = vpop.f32.mrb[0].mxu0
        %v778 = vadd.f32 0.0, %v777
        %v779 = vpop.f32.mrb[0].mxu0
        %780 = vmatprep.mubr.f32.mxu0 %v504
        %781 = vmatmul.mubr.f32.gmra.mrb[0].mxu0 %v503
        %v782 = vpop.f32.mrb[0].mxu0
        %v783 = vadd.f32 0.0, %v782
        %v784 = vpop.f32.mrb[0].mxu0
        %785 = vmatprep.mubr.f32.mxu0 %v508
        %786 = vmatmul.mubr.f32.gmra.mrb[0].mxu0 %v507
        %v787 = vpop.f32.mrb[0].mxu0
        %v788 = vadd.f32 0.0, %v787
        %v789 = vpop.f32.mrb[0].mxu0
        %790 = vmatprep.mubr.f32.mxu0 %v512
        %791 = vmatmul.mubr.f32.gmra.mrb[0].mxu0 %v511
        %v792 = vpop.f32.mrb[0].mxu0
        %v793 = vadd.f32 0.0, %v792
        %v794 = vpop.f32.mrb[0].mxu0
        %795 = vmatprep.mubr.f32.mxu0 %v516
        %796 = vmatmul.mubr.f32.gmra.mrb[0].mxu0 %v515
        %v797 = vpop.f32.mrb[0].mxu0
        %v798 = vadd.f32 0.0, %v797
        %v799 = vpop.f32.mrb[0].mxu0
        %800 = vmatprep.mubr.f32.mxu0 %v520
        %801 = vmatmul.mubr.f32.gmra.mrb[0].mxu0 %v519
        %v802 = vpop.f32.mrb[0].mxu0
        %v803 = vadd.f32 0.0, %v802
        %v804 = vpop.f32.mrb[0].mxu0
        %805 = vmatprep.mubr.f32.mxu0 %v524
        %806 = vmatmul.mubr.f32.gmra.mrb[0].mxu0 %v523
        %v807 = vpop.f32.mrb[0].mxu0
        %v808 = vadd.f32 0.0, %v807
        %v809 = vpop.f32.mrb[0].mxu0
        %810 = vmatprep.mubr.f32.mxu0 %v528
        %811 = vmatmul.mubr.f32.gmra.mrb[0].mxu0 %v527
        %v812 = vpop.f32.mrb[0].mxu0
        %v813 = vadd.f32 0.0, %v812
        %v814 = vpop.f32.mrb[0].mxu0
        %815 = vmatprep.mubr.f32.mxu0 %v532
        %816 = vmatmul.mubr.f32.gmra.mrb[0].mxu0 %v531
        %v817 = vpop.f32.mrb[0].mxu0
        %v818 = vadd.f32 0.0, %v817
        %v819 = vpop.f32.mrb[0].mxu0
        %820 = vmatprep.mubr.f32.mxu0 %v536
        %821 = vmatmul.mubr.f32.gmra.mrb[0].mxu0 %v535
        %v822 = vpop.f32.mrb[0].mxu0
        %v823 = vadd.f32 0.0, %v822
        %v824 = vpop.f32.mrb[0].mxu0
        %825 = vmatprep.mubr.f32.mxu0 %v540
        %826 = vmatmul.mubr.f32.gmra.mrb[0].mxu0 %v539
        %v827 = vpop.f32.mrb[0].mxu0
        %v828 = vadd.f32 0.0, %v827
        %v829 = vpop.f32.mrb[0].mxu0
        %830 = vmatprep.mubr.f32.mxu0 %v544
        %831 = vmatmul.mubr.f32.gmra.mrb[0].mxu0 %v543
        %v832 = vpop.f32.mrb[0].mxu0
        %v833 = vadd.f32 0.0, %v832
        %v834 = vpop.f32.mrb[0].mxu0
        %835 = vdwg.mxu0
        %836 = vmatprep.subr.mxu0 0.0
        %837 = vmatpush1.msra.mxu0 %v579
        %838 = vmatprep.subr.mxu0 0.0
        %839 = vmatpush1.msra.mxu0 %v580
        %840 = vmatprep.subr.mxu0 0.0
        %841 = vmatpush1.msra.mxu0 %v581
        %842 = vmatprep.subr.mxu0 0.0
        %843 = vmatpush1.msra.mxu0 %v582
        %844 = vmatprep.subr.mxu0 0.0
        %845 = vmatpush1.msra.mxu0 %v583
        %846 = vmatprep.subr.mxu0 0.0
        %847 = vmatpush1.msra.mxu0 %v584
        %848 = vmatprep.subr.mxu0 0.0
        %849 = vmatpush1.msra.mxu0 %v585
        %850 = vmatprep.subr.mxu0 0.0
        %851 = vmatpush1.msra.mxu0 %v586
        %852 = vmatprep.subr.mxu0 0.0
        %853 = vmatpush1.msra.mxu0 %v587
        %854 = vmatprep.subr.mxu0 0.0
        %855 = vmatpush1.msra.mxu0 %v588
        %856 = vmatprep.subr.mxu0 0.0
        %857 = vmatpush1.msra.mxu0 %v589
        %858 = vmatprep.subr.mxu0 0.0
        %859 = vmatpush1.msra.mxu0 %v590
        %860 = vmatprep.subr.mxu0 0.0
        %861 = vmatpush1.msra.mxu0 %v591
        %862 = vmatprep.subr.mxu0 0.0
        %863 = vmatpush1.msra.mxu0 %v592
        %864 = vmatprep.subr.mxu0 0.0
        %865 = vmatpush1.msra.mxu0 %v593
        %866 = vmatprep.subr.mxu0 0.0
        %867 = vmatpush1.msra.mxu0 %v594
        %868 = vmatprep.subr.mxu0 0.0
        %869 = vmatpush1.msra.mxu0 %v595
        %870 = vmatprep.subr.mxu0 0.0
        %871 = vmatpush1.msra.mxu0 %v596
        %872 = vmatprep.subr.mxu0 0.0
        %873 = vmatpush1.msra.mxu0 %v597
        %874 = vmatprep.subr.mxu0 0.0
        %875 = vmatpush1.msra.mxu0 %v598
        %876 = vmatprep.subr.mxu0 0.0
        %877 = vmatpush1.msra.mxu0 %v599
        %878 = vmatprep.subr.mxu0 0.0
        %879 = vmatpush1.msra.mxu0 %v600
        %880 = vmatprep.subr.mxu0 0.0
        %881 = vmatpush1.msra.mxu0 %v601
        %882 = vmatprep.subr.mxu0 0.0
        %883 = vmatpush1.msra.mxu0 %v602
        %884 = vmatprep.subr.mxu0 0.0
        %885 = vmatpush1.msra.mxu0 %v603
        %886 = vmatprep.subr.mxu0 0.0
        %887 = vmatpush1.msra.mxu0 %v604
        %888 = vmatprep.subr.mxu0 0.0
        %889 = vmatpush1.msra.mxu0 %v605
        %890 = vmatprep.subr.mxu0 0.0
        %891 = vmatpush1.msra.mxu0 %v606
        %892 = vmatprep.subr.mxu0 0.0
        %893 = vmatpush1.msra.mxu0 %v607
        %894 = vmatprep.subr.mxu0 0.0
        %895 = vmatpush1.msra.mxu0 %v608
        %896 = vmatprep.subr.mxu0 0.0
        %897 = vmatpush1.msra.mxu0 %v609
        %898 = vmatprep.subr.mxu0 0.0
        %899 = vmatpush1.msra.mxu0 %v610
        %900 = vmatprep.mubr.f32.mxu0 %v422
        %901 = vmatmul.mubr.f32.gmra.mrb[0].mxu0 %v421
        %v902 = vpop.f32.mrb[0].mxu0
        %v903 = vadd.f32 %v678, %v902
        %v904 = vpop.f32.mrb[0].mxu0
        %905 = vmatprep.mubr.f32.mxu0 %v426
        %906 = vmatmul.mubr.f32.gmra.mrb[0].mxu0 %v425
        %v907 = vpop.f32.mrb[0].mxu0
        %v908 = vadd.f32 %v683, %v907
        %v909 = vpop.f32.mrb[0].mxu0
        %910 = vmatprep.mubr.f32.mxu0 %v430
        %911 = vmatmul.mubr.f32.gmra.mrb[0].mxu0 %v429
        %v912 = vpop.f32.mrb[0].mxu0
        %v913 = vadd.f32 %v688, %v912
        %v914 = vpop.f32.mrb[0].mxu0
        %915 = vmatprep.mubr.f32.mxu0 %v434
        %916 = vmatmul.mubr.f32.gmra.mrb[0].mxu0 %v433
        %v917 = vpop.f32.mrb[0].mxu0
        %v918 = vadd.f32 %v693, %v917
        %v919 = vpop.f32.mrb[0].mxu0
        %920 = vmatprep.mubr.f32.mxu0 %v438
        %921 = vmatmul.mubr.f32.gmra.mrb[0].mxu0 %v437
        %v922 = vpop.f32.mrb[0].mxu0
        %v923 = vadd.f32 %v698, %v922
        %v924 = vpop.f32.mrb[0].mxu0
        %925 = vmatprep.mubr.f32.mxu0 %v442
        %926 = vmatmul.mubr.f32.gmra.mrb[0].mxu0 %v441
        %v927 = vpop.f32.mrb[0].mxu0
        %v928 = vadd.f32 %v703, %v927
        %v929 = vpop.f32.mrb[0].mxu0
        %930 = vmatprep.mubr.f32.mxu0 %v446
        %931 = vmatmul.mubr.f32.gmra.mrb[0].mxu0 %v445
        %v932 = vpop.f32.mrb[0].mxu0
        %v933 = vadd.f32 %v708, %v932
        %v934 = vpop.f32.mrb[0].mxu0
        %935 = vmatprep.mubr.f32.mxu0 %v450
        %936 = vmatmul.mubr.f32.gmra.mrb[0].mxu0 %v449
        %v937 = vpop.f32.mrb[0].mxu0
        %v938 = vadd.f32 %v713, %v937
        %v939 = vpop.f32.mrb[0].mxu0
        %940 = vmatprep.mubr.f32.mxu0 %v454
        %941 = vmatmul.mubr.f32.gmra.mrb[0].mxu0 %v453
        %v942 = vpop.f32.mrb[0].mxu0
        %v943 = vadd.f32 %v718, %v942
        %v944 = vpop.f32.mrb[0].mxu0
        %945 = vmatprep.mubr.f32.mxu0 %v458
        %946 = vmatmul.mubr.f32.gmra.mrb[0].mxu0 %v457
        %v947 = vpop.f32.mrb[0].mxu0
        %v948 = vadd.f32 %v723, %v947
        %v949 = vpop.f32.mrb[0].mxu0
        %950 = vmatprep.mubr.f32.mxu0 %v462
        %951 = vmatmul.mubr.f32.gmra.mrb[0].mxu0 %v461
        %v952 = vpop.f32.mrb[0].mxu0
        %v953 = vadd.f32 %v728, %v952
        %v954 = vpop.f32.mrb[0].mxu0
        %955 = vmatprep.mubr.f32.mxu0 %v466
        %956 = vmatmul.mubr.f32.gmra.mrb[0].mxu0 %v465
        %v957 = vpop.f32.mrb[0].mxu0
        %v958 = vadd.f32 %v733, %v957
        %v959 = vpop.f32.mrb[0].mxu0
        %960 = vmatprep.mubr.f32.mxu0 %v470
        %961 = vmatmul.mubr.f32.gmra.mrb[0].mxu0 %v469
        %v962 = vpop.f32.mrb[0].mxu0
        %v963 = vadd.f32 %v738, %v962
        %v964 = vpop.f32.mrb[0].mxu0
        %965 = vmatprep.mubr.f32.mxu0 %v474
        %966 = vmatmul.mubr.f32.gmra.mrb[0].mxu0 %v473
        %v967 = vpop.f32.mrb[0].mxu0
        %v968 = vadd.f32 %v743, %v967
        %v969 = vpop.f32.mrb[0].mxu0
        %970 = vmatprep.mubr.f32.mxu0 %v478
        %971 = vmatmul.mubr.f32.gmra.mrb[0].mxu0 %v477
        %v972 = vpop.f32.mrb[0].mxu0
        %v973 = vadd.f32 %v748, %v972
        %v974 = vpop.f32.mrb[0].mxu0
        %975 = vmatprep.mubr.f32.mxu0 %v482
        %976 = vmatmul.mubr.f32.gmra.mrb[0].mxu0 %v481
        %v977 = vpop.f32.mrb[0].mxu0
        %v978 = vadd.f32 %v753, %v977
        %v979 = vpop.f32.mrb[0].mxu0
        %980 = vmatprep.mubr.f32.mxu0 %v486
        %981 = vmatmul.mubr.f32.gmra.mrb[0].mxu0 %v485
        %v982 = vpop.f32.mrb[0].mxu0
        %v983 = vadd.f32 %v758, %v982
        %v984 = vpop.f32.mrb[0].mxu0
        %985 = vmatprep.mubr.f32.mxu0 %v490
        %986 = vmatmul.mubr.f32.gmra.mrb[0].mxu0 %v489
        %v987 = vpop.f32.mrb[0].mxu0
        %v988 = vadd.f32 %v763, %v987
        %v989 = vpop.f32.mrb[0].mxu0
        %990 = vmatprep.mubr.f32.mxu0 %v494
        %991 = vmatmul.mubr.f32.gmra.mrb[0].mxu0 %v493
        %v992 = vpop.f32.mrb[0].mxu0
        %v993 = vadd.f32 %v768, %v992
        %v994 = vpop.f32.mrb[0].mxu0
        %995 = vmatprep.mubr.f32.mxu0 %v498
        %996 = vmatmul.mubr.f32.gmra.mrb[0].mxu0 %v497
        %v997 = vpop.f32.mrb[0].mxu0
        %v998 = vadd.f32 %v773, %v997
        %v999 = vpop.f32.mrb[0].mxu0
        %1000 = vmatprep.mubr.f32.mxu0 %v502
        %1001 = vmatmul.mubr.f32.gmra.mrb[0].mxu0 %v501
        %v1002 = vpop.f32.mrb[0].mxu0
        %v1003 = vadd.f32 %v778, %v1002
        %v1004 = vpop.f32.mrb[0].mxu0
        %1005 = vmatprep.mubr.f32.mxu0 %v506
        %1006 = vmatmul.mubr.f32.gmra.mrb[0].mxu0 %v505
        %v1007 = vpop.f32.mrb[0].mxu0
        %v1008 = vadd.f32 %v783, %v1007
        %v1009 = vpop.f32.mrb[0].mxu0
        %1010 = vmatprep.mubr.f32.mxu0 %v510
        %1011 = vmatmul.mubr.f32.gmra.mrb[0].mxu0 %v509
        %v1012 = vpop.f32.mrb[0].mxu0
        %v1013 = vadd.f32 %v788, %v1012
        %v1014 = vpop.f32.mrb[0].mxu0
        %1015 = vmatprep.mubr.f32.mxu0 %v514
        %1016 = vmatmul.mubr.f32.gmra.mrb[0].mxu0 %v513
        %v1017 = vpop.f32.mrb[0].mxu0
        %v1018 = vadd.f32 %v793, %v1017
        %v1019 = vpop.f32.mrb[0].mxu0
        %1020 = vmatprep.mubr.f32.mxu0 %v518
        %1021 = vmatmul.mubr.f32.gmra.mrb[0].mxu0 %v517
        %v1022 = vpop.f32.mrb[0].mxu0
        %v1023 = vadd.f32 %v798, %v1022
        %v1024 = vpop.f32.mrb[0].mxu0
        %1025 = vmatprep.mubr.f32.mxu0 %v522
        %1026 = vmatmul.mubr.f32.gmra.mrb[0].mxu0 %v521
        %v1027 = vpop.f32.mrb[0].mxu0
        %v1028 = vadd.f32 %v803, %v1027
        %v1029 = vpop.f32.mrb[0].mxu0
        %1030 = vmatprep.mubr.f32.mxu0 %v526
        %1031 = vmatmul.mubr.f32.gmra.mrb[0].mxu0 %v525
        %v1032 = vpop.f32.mrb[0].mxu0
        %v1033 = vadd.f32 %v808, %v1032
        %v1034 = vpop.f32.mrb[0].mxu0
        %1035 = vmatprep.mubr.f32.mxu0 %v530
        %1036 = vmatmul.mubr.f32.gmra.mrb[0].mxu0 %v529
        %v1037 = vpop.f32.mrb[0].mxu0
        %v1038 = vadd.f32 %v813, %v1037
        %v1039 = vpop.f32.mrb[0].mxu0
        %1040 = vmatprep.mubr.f32.mxu0 %v534
        %1041 = vmatmul.mubr.f32.gmra.mrb[0].mxu0 %v533
        %v1042 = vpop.f32.mrb[0].mxu0
        %v1043 = vadd.f32 %v818, %v1042
        %v1044 = vpop.f32.mrb[0].mxu0
        %1045 = vmatprep.mubr.f32.mxu0 %v538
        %1046 = vmatmul.mubr.f32.gmra.mrb[0].mxu0 %v537
        %v1047 = vpop.f32.mrb[0].mxu0
        %v1048 = vadd.f32 %v823, %v1047
        %v1049 = vpop.f32.mrb[0].mxu0
        %1050 = vmatprep.mubr.f32.mxu0 %v542
        %1051 = vmatmul.mubr.f32.gmra.mrb[0].mxu0 %v541
        %v1052 = vpop.f32.mrb[0].mxu0
        %v1053 = vadd.f32 %v828, %v1052
        %v1054 = vpop.f32.mrb[0].mxu0
        %1055 = vmatprep.mubr.f32.mxu0 %v546
        %1056 = vmatmul.mubr.f32.gmra.mrb[0].mxu0 %v545
        %v1057 = vpop.f32.mrb[0].mxu0
        %v1058 = vadd.f32 %v833, %v1057
        %v1059 = vpop.f32.mrb[0].mxu0
        %1060 = vdwg.mxu0
        %v1061 = vadd.f32 %v387, %v903
        %v1062 = vadd.f32 %v388, %v908
        %v1063 = vadd.f32 %v389, %v913
        %v1064 = vadd.f32 %v390, %v918
        %v1065 = vadd.f32 %v391, %v923
        %v1066 = vadd.f32 %v392, %v928
        %v1067 = vadd.f32 %v393, %v933
        %v1068 = vadd.f32 %v394, %v938
        %v1069 = vadd.f32 %v395, %v943
        %v1070 = vadd.f32 %v396, %v948
        %v1071 = vadd.f32 %v397, %v953
        %v1072 = vadd.f32 %v398, %v958
        %v1073 = vadd.f32 %v399, %v963
        %v1074 = vadd.f32 %v400, %v968
        %v1075 = vadd.f32 %v401, %v973
        %v1076 = vadd.f32 %v402, %v978
        %v1077 = vadd.f32 %v403, %v983
        %v1078 = vadd.f32 %v404, %v988
        %v1079 = vadd.f32 %v405, %v993
        %v1080 = vadd.f32 %v406, %v998
        %v1081 = vadd.f32 %v407, %v1003
        %v1082 = vadd.f32 %v408, %v1008
        %v1083 = vadd.f32 %v409, %v1013
        %v1084 = vadd.f32 %v410, %v1018
        %v1085 = vadd.f32 %v411, %v1023
        %v1086 = vadd.f32 %v412, %v1028
        %v1087 = vadd.f32 %v413, %v1033
        %v1088 = vadd.f32 %v414, %v1038
        %v1089 = vadd.f32 %v415, %v1043
        %v1090 = vadd.f32 %v416, %v1048
        %v1091 = vadd.f32 %v417, %v1053
        %v1092 = vadd.f32 %v418, %v1058
        %1093 = vst [vmem:[#allocation2] sm:$0xff] %v1061
        %1094 = vst [vmem:[#allocation2 + $0x8] sm:$0xff] %v1062
        %1095 = vst [vmem:[#allocation2 + $0x10] sm:$0xff] %v1063
        %1096 = vst [vmem:[#allocation2 + $0x18] sm:$0xff] %v1064
        %1097 = vst [vmem:[#allocation2 + $0x20] sm:$0xff] %v1065
        %1098 = vst [vmem:[#allocation2 + $0x28] sm:$0xff] %v1066
        %1099 = vst [vmem:[#allocation2 + $0x30] sm:$0xff] %v1067
        %1100 = vst [vmem:[#allocation2 + $0x38] sm:$0xff] %v1068
        %1101 = vst [vmem:[#allocation2 + $0x40] sm:$0xff] %v1069
        %1102 = vst [vmem:[#allocation2 + $0x48] sm:$0xff] %v1070
        %1103 = vst [vmem:[#allocation2 + $0x50] sm:$0xff] %v1071
        %1104 = vst [vmem:[#allocation2 + $0x58] sm:$0xff] %v1072
        %1105 = vst [vmem:[#allocation2 + $0x60] sm:$0xff] %v1073
        %1106 = vst [vmem:[#allocation2 + $0x68] sm:$0xff] %v1074
        %1107 = vst [vmem:[#allocation2 + $0x70] sm:$0xff] %v1075
        %1108 = vst [vmem:[#allocation2 + $0x78] sm:$0xff] %v1076
        %1109 = vst [vmem:[#allocation2 + $0x80] sm:$0xff] %v1077
        %1110 = vst [vmem:[#allocation2 + $0x88] sm:$0xff] %v1078
        %1111 = vst [vmem:[#allocation2 + $0x90] sm:$0xff] %v1079
        %1112 = vst [vmem:[#allocation2 + $0x98] sm:$0xff] %v1080
        %1113 = vst [vmem:[#allocation2 + $0xa0] sm:$0xff] %v1081
        %1114 = vst [vmem:[#allocation2 + $0xa8] sm:$0xff] %v1082
        %1115 = vst [vmem:[#allocation2 + $0xb0] sm:$0xff] %v1083
        %1116 = vst [vmem:[#allocation2 + $0xb8] sm:$0xff] %v1084
        %1117 = vst [vmem:[#allocation2 + $0xc0] sm:$0xff] %v1085
        %1118 = vst [vmem:[#allocation2 + $0xc8] sm:$0xff] %v1086
        %1119 = vst [vmem:[#allocation2 + $0xd0] sm:$0xff] %v1087
        %1120 = vst [vmem:[#allocation2 + $0xd8] sm:$0xff] %v1088
        %1121 = vst [vmem:[#allocation2 + $0xe0] sm:$0xff] %v1089
        %1122 = vst [vmem:[#allocation2 + $0xe8] sm:$0xff] %v1090
        %1123 = vst [vmem:[#allocation2 + $0xf0] sm:$0xff] %v1091
        %1124 = vst [vmem:[#allocation2 + $0xf8] sm:$0xff] %v1092
        // Predicated region
        $region65: #{tpu_custom_call.1} parent=39 // pred_check
          %p1125 = pneg %p351
        $region66: #{tpu_custom_call.1} parent=39 // pred_check_branch
          %1127 = sbr.rel (%p1125) target = $region68
        $region67: #{tpu_custom_call.1} parent=39 // pred_region
          %s1128 = sld [smem:[#allocation3]]
          %s1129 = sld [smem:[#allocation3 + $0x1]]
          %v1130 = vld [vmem:[#allocation2] sm:$0xff]
          %v1131 = vld [vmem:[#allocation2 + $0x8] sm:$0xff]
          %v1132 = vld [vmem:[#allocation2 + $0x10] sm:$0xff]
          %v1133 = vld [vmem:[#allocation2 + $0x18] sm:$0xff]
          %v1134 = vld [vmem:[#allocation2 + $0x20] sm:$0xff]
          %v1135 = vld [vmem:[#allocation2 + $0x28] sm:$0xff]
          %v1136 = vld [vmem:[#allocation2 + $0x30] sm:$0xff]
          %v1137 = vld [vmem:[#allocation2 + $0x38] sm:$0xff]
          %v1138 = vld [vmem:[#allocation2 + $0x40] sm:$0xff]
          %v1139 = vld [vmem:[#allocation2 + $0x48] sm:$0xff]
          %v1140 = vld [vmem:[#allocation2 + $0x50] sm:$0xff]
          %v1141 = vld [vmem:[#allocation2 + $0x58] sm:$0xff]
          %v1142 = vld [vmem:[#allocation2 + $0x60] sm:$0xff]
          %v1143 = vld [vmem:[#allocation2 + $0x68] sm:$0xff]
          %v1144 = vld [vmem:[#allocation2 + $0x70] sm:$0xff]
          %v1145 = vld [vmem:[#allocation2 + $0x78] sm:$0xff]
          %v1146 = vld [vmem:[#allocation2 + $0x80] sm:$0xff]
          %v1147 = vld [vmem:[#allocation2 + $0x88] sm:$0xff]
          %v1148 = vld [vmem:[#allocation2 + $0x90] sm:$0xff]
          %v1149 = vld [vmem:[#allocation2 + $0x98] sm:$0xff]
          %v1150 = vld [vmem:[#allocation2 + $0xa0] sm:$0xff]
          %v1151 = vld [vmem:[#allocation2 + $0xa8] sm:$0xff]
          %v1152 = vld [vmem:[#allocation2 + $0xb0] sm:$0xff]
          %v1153 = vld [vmem:[#allocation2 + $0xb8] sm:$0xff]
          %v1154 = vld [vmem:[#allocation2 + $0xc0] sm:$0xff]
          %v1155 = vld [vmem:[#allocation2 + $0xc8] sm:$0xff]
          %v1156 = vld [vmem:[#allocation2 + $0xd0] sm:$0xff]
          %v1157 = vld [vmem:[#allocation2 + $0xd8] sm:$0xff]
          %v1158 = vld [vmem:[#allocation2 + $0xe0] sm:$0xff]
          %v1159 = vld [vmem:[#allocation2 + $0xe8] sm:$0xff]
          %v1160 = vld [vmem:[#allocation2 + $0xf0] sm:$0xff]
          %v1161 = vld [vmem:[#allocation2 + $0xf8] sm:$0xff]
          %s1162 = ssub.f32 1.0, %s1128
          %v1163 = vstv %s1162
          %v1164 = vmul.f32 %v1163, %v1130
          %v1165 = vmul.f32 %v1163, %v1131
          %v1166 = vmul.f32 %v1163, %v1132
          %v1167 = vmul.f32 %v1163, %v1133
          %v1168 = vmul.f32 %v1163, %v1134
          %v1169 = vmul.f32 %v1163, %v1135
          %v1170 = vmul.f32 %v1163, %v1136
          %v1171 = vmul.f32 %v1163, %v1137
          %v1172 = vmul.f32 %v1163, %v1138
          %v1173 = vmul.f32 %v1163, %v1139
          %v1174 = vmul.f32 %v1163, %v1140
          %v1175 = vmul.f32 %v1163, %v1141
          %v1176 = vmul.f32 %v1163, %v1142
          %v1177 = vmul.f32 %v1163, %v1143
          %v1178 = vmul.f32 %v1163, %v1144
          %v1179 = vmul.f32 %v1163, %v1145
          %v1180 = vmul.f32 %v1163, %v1146
          %v1181 = vmul.f32 %v1163, %v1147
          %v1182 = vmul.f32 %v1163, %v1148
          %v1183 = vmul.f32 %v1163, %v1149
          %v1184 = vmul.f32 %v1163, %v1150
          %v1185 = vmul.f32 %v1163, %v1151
          %v1186 = vmul.f32 %v1163, %v1152
          %v1187 = vmul.f32 %v1163, %v1153
          %v1188 = vmul.f32 %v1163, %v1154
          %v1189 = vmul.f32 %v1163, %v1155
          %v1190 = vmul.f32 %v1163, %v1156
          %v1191 = vmul.f32 %v1163, %v1157
          %v1192 = vmul.f32 %v1163, %v1158
          %v1193 = vmul.f32 %v1163, %v1159
          %v1194 = vmul.f32 %v1163, %v1160
          %v1195 = vmul.f32 %v1163, %v1161
          %v1196 = vld [vmem:[%s309] sm:$0xff]
          %v1197 = vld [vmem:[%s309 + $0x8] sm:$0xff]
          %v1198 = vld [vmem:[%s309 + $0x10] sm:$0xff]
          %v1199 = vld [vmem:[%s309 + $0x18] sm:$0xff]
          %v1200 = vld [vmem:[%s309 + $0x20] sm:$0xff]
          %v1201 = vld [vmem:[%s309 + $0x28] sm:$0xff]
          %v1202 = vld [vmem:[%s309 + $0x30] sm:$0xff]
          %v1203 = vld [vmem:[%s309 + $0x38] sm:$0xff]
          %v1204 = vld [vmem:[%s309 + $0x40] sm:$0xff]
          %v1205 = vld [vmem:[%s309 + $0x48] sm:$0xff]
          %v1206 = vld [vmem:[%s309 + $0x50] sm:$0xff]
          %v1207 = vld [vmem:[%s309 + $0x58] sm:$0xff]
          %v1208 = vld [vmem:[%s309 + $0x60] sm:$0xff]
          %v1209 = vld [vmem:[%s309 + $0x68] sm:$0xff]
          %v1210 = vld [vmem:[%s309 + $0x70] sm:$0xff]
          %v1211 = vld [vmem:[%s309 + $0x78] sm:$0xff]
          %v1212 = vld [vmem:[%s309 + $0x80] sm:$0xff]
          %v1213 = vld [vmem:[%s309 + $0x88] sm:$0xff]
          %v1214 = vld [vmem:[%s309 + $0x90] sm:$0xff]
          %v1215 = vld [vmem:[%s309 + $0x98] sm:$0xff]
          %v1216 = vld [vmem:[%s309 + $0xa0] sm:$0xff]
          %v1217 = vld [vmem:[%s309 + $0xa8] sm:$0xff]
          %v1218 = vld [vmem:[%s309 + $0xb0] sm:$0xff]
          %v1219 = vld [vmem:[%s309 + $0xb8] sm:$0xff]
          %v1220 = vld [vmem:[%s309 + $0xc0] sm:$0xff]
          %v1221 = vld [vmem:[%s309 + $0xc8] sm:$0xff]
          %v1222 = vld [vmem:[%s309 + $0xd0] sm:$0xff]
          %v1223 = vld [vmem:[%s309 + $0xd8] sm:$0xff]
          %v1224 = vld [vmem:[%s309 + $0xe0] sm:$0xff]
          %v1225 = vld [vmem:[%s309 + $0xe8] sm:$0xff]
          %v1226 = vld [vmem:[%s309 + $0xf0] sm:$0xff]
          %v1227 = vld [vmem:[%s309 + $0xf8] sm:$0xff]
          %v1228 = vstv %s1128
          %v1229 = vmul.f32 %v1228, %v1196
          %v1230 = vmul.f32 %v1228, %v1197
          %v1231 = vmul.f32 %v1228, %v1198
          %v1232 = vmul.f32 %v1228, %v1199
          %v1233 = vmul.f32 %v1228, %v1200
          %v1234 = vmul.f32 %v1228, %v1201
          %v1235 = vmul.f32 %v1228, %v1202
          %v1236 = vmul.f32 %v1228, %v1203
          %v1237 = vmul.f32 %v1228, %v1204
          %v1238 = vmul.f32 %v1228, %v1205
          %v1239 = vmul.f32 %v1228, %v1206
          %v1240 = vmul.f32 %v1228, %v1207
          %v1241 = vmul.f32 %v1228, %v1208
          %v1242 = vmul.f32 %v1228, %v1209
          %v1243 = vmul.f32 %v1228, %v1210
          %v1244 = vmul.f32 %v1228, %v1211
          %v1245 = vmul.f32 %v1228, %v1212
          %v1246 = vmul.f32 %v1228, %v1213
          %v1247 = vmul.f32 %v1228, %v1214
          %v1248 = vmul.f32 %v1228, %v1215
          %v1249 = vmul.f32 %v1228, %v1216
          %v1250 = vmul.f32 %v1228, %v1217
          %v1251 = vmul.f32 %v1228, %v1218
          %v1252 = vmul.f32 %v1228, %v1219
          %v1253 = vmul.f32 %v1228, %v1220
          %v1254 = vmul.f32 %v1228, %v1221
          %v1255 = vmul.f32 %v1228, %v1222
          %v1256 = vmul.f32 %v1228, %v1223
          %v1257 = vmul.f32 %v1228, %v1224
          %v1258 = vmul.f32 %v1228, %v1225
          %v1259 = vmul.f32 %v1228, %v1226
          %v1260 = vmul.f32 %v1228, %v1227
          %v1261 = vadd.f32 %v1164, %v1229
          %v1262 = vadd.f32 %v1165, %v1230
          %v1263 = vadd.f32 %v1166, %v1231
          %v1264 = vadd.f32 %v1167, %v1232
          %v1265 = vadd.f32 %v1168, %v1233
          %v1266 = vadd.f32 %v1169, %v1234
          %v1267 = vadd.f32 %v1170, %v1235
          %v1268 = vadd.f32 %v1171, %v1236
          %v1269 = vadd.f32 %v1172, %v1237
          %v1270 = vadd.f32 %v1173, %v1238
          %v1271 = vadd.f32 %v1174, %v1239
          %v1272 = vadd.f32 %v1175, %v1240
          %v1273 = vadd.f32 %v1176, %v1241
          %v1274 = vadd.f32 %v1177, %v1242
          %v1275 = vadd.f32 %v1178, %v1243
          %v1276 = vadd.f32 %v1179, %v1244
          %v1277 = vadd.f32 %v1180, %v1245
          %v1278 = vadd.f32 %v1181, %v1246
          %v1279 = vadd.f32 %v1182, %v1247
          %v1280 = vadd.f32 %v1183, %v1248
          %v1281 = vadd.f32 %v1184, %v1249
          %v1282 = vadd.f32 %v1185, %v1250
          %v1283 = vadd.f32 %v1186, %v1251
          %v1284 = vadd.f32 %v1187, %v1252
          %v1285 = vadd.f32 %v1188, %v1253
          %v1286 = vadd.f32 %v1189, %v1254
          %v1287 = vadd.f32 %v1190, %v1255
          %v1288 = vadd.f32 %v1191, %v1256
          %v1289 = vadd.f32 %v1192, %v1257
          %v1290 = vadd.f32 %v1193, %v1258
          %v1291 = vadd.f32 %v1194, %v1259
          %v1292 = vadd.f32 %v1195, %v1260
          %v1293 = vld [vmem:[#allocation11] sm:$0xff]
          %v1294 = vld [vmem:[#allocation11 + $0x8] sm:$0xff]
          %v1295 = vld [vmem:[#allocation11 + $0x10] sm:$0xff]
          %v1296 = vld [vmem:[#allocation11 + $0x18] sm:$0xff]
          %v1297 = vld [vmem:[#allocation11 + $0x20] sm:$0xff]
          %v1298 = vld [vmem:[#allocation11 + $0x28] sm:$0xff]
          %v1299 = vld [vmem:[#allocation11 + $0x30] sm:$0xff]
          %v1300 = vld [vmem:[#allocation11 + $0x38] sm:$0xff]
          %v1301 = vld [vmem:[#allocation11 + $0x40] sm:$0xff]
          %v1302 = vld [vmem:[#allocation11 + $0x48] sm:$0xff]
          %v1303 = vld [vmem:[#allocation11 + $0x50] sm:$0xff]
          %v1304 = vld [vmem:[#allocation11 + $0x58] sm:$0xff]
          %v1305 = vld [vmem:[#allocation11 + $0x60] sm:$0xff]
          %v1306 = vld [vmem:[#allocation11 + $0x68] sm:$0xff]
          %v1307 = vld [vmem:[#allocation11 + $0x70] sm:$0xff]
          %v1308 = vld [vmem:[#allocation11 + $0x78] sm:$0xff]
          %1309 = vmatprep.subr.mxu0 0.0
          %1310 = vmatpush1.msra.mxu0 %v1293
          %1311 = vmatprep.subr.mxu0 0.0
          %1312 = vmatpush1.msra.mxu0 %v1294
          %1313 = vmatprep.subr.mxu0 0.0
          %1314 = vmatpush1.msra.mxu0 %v1295
          %1315 = vmatprep.subr.mxu0 0.0
          %1316 = vmatpush1.msra.mxu0 %v1296
          %1317 = vmatprep.subr.mxu0 0.0
          %1318 = vmatpush1.msra.mxu0 %v1297
          %1319 = vmatprep.subr.mxu0 0.0
          %1320 = vmatpush1.msra.mxu0 %v1298
          %1321 = vmatprep.subr.mxu0 0.0
          %1322 = vmatpush1.msra.mxu0 %v1299
          %1323 = vmatprep.subr.mxu0 0.0
          %1324 = vmatpush1.msra.mxu0 %v1300
          %1325 = vmatprep.subr.mxu0 0.0
          %1326 = vmatpush1.msra.mxu0 %v1301
          %1327 = vmatprep.subr.mxu0 0.0
          %1328 = vmatpush1.msra.mxu0 %v1302
          %1329 = vmatprep.subr.mxu0 0.0
          %1330 = vmatpush1.msra.mxu0 %v1303
          %1331 = vmatprep.subr.mxu0 0.0
          %1332 = vmatpush1.msra.mxu0 %v1304
          %1333 = vmatprep.subr.mxu0 0.0
          %1334 = vmatpush1.msra.mxu0 %v1305
          %1335 = vmatprep.subr.mxu0 0.0
          %1336 = vmatpush1.msra.mxu0 %v1306
          %1337 = vmatprep.subr.mxu0 0.0
          %1338 = vmatpush1.msra.mxu0 %v1307
          %1339 = vmatprep.subr.mxu0 0.0
          %1340 = vmatpush1.msra.mxu0 %v1308
          %1341 = vmatprep.subr.mxu0 0.0
          %1342 = vmatpush1.msra.mxu0 0.0
          %1343 = vmatprep.subr.mxu0 0.0
          %1344 = vmatpush1.msra.mxu0 0.0
          %1345 = vmatprep.subr.mxu0 0.0
          %1346 = vmatpush1.msra.mxu0 0.0
          %1347 = vmatprep.subr.mxu0 0.0
          %1348 = vmatpush1.msra.mxu0 0.0
          %1349 = vmatprep.subr.mxu0 0.0
          %1350 = vmatpush1.msra.mxu0 0.0
          %1351 = vmatprep.subr.mxu0 0.0
          %1352 = vmatpush1.msra.mxu0 0.0
          %1353 = vmatprep.subr.mxu0 0.0
          %1354 = vmatpush1.msra.mxu0 0.0
          %1355 = vmatprep.subr.mxu0 0.0
          %1356 = vmatpush1.msra.mxu0 0.0
          %1357 = vmatprep.subr.mxu0 0.0
          %1358 = vmatpush1.msra.mxu0 0.0
          %1359 = vmatprep.subr.mxu0 0.0
          %1360 = vmatpush1.msra.mxu0 0.0
          %1361 = vmatprep.subr.mxu0 0.0
          %1362 = vmatpush1.msra.mxu0 0.0
          %1363 = vmatprep.subr.mxu0 0.0
          %1364 = vmatpush1.msra.mxu0 0.0
          %1365 = vmatprep.subr.mxu0 0.0
          %1366 = vmatpush1.msra.mxu0 0.0
          %1367 = vmatprep.subr.mxu0 0.0
          %1368 = vmatpush1.msra.mxu0 0.0
          %1369 = vmatprep.subr.mxu0 0.0
          %1370 = vmatpush1.msra.mxu0 0.0
          %1371 = vmatprep.subr.mxu0 0.0
          %1372 = vmatpush1.msra.mxu0 0.0
          %1373 = vmatprep.mubr.f32.mxu0 0.0
          %1374 = vmatmul.mubr.f32.gmra.mrb[0].mxu0 %v1261
          %v1375 = vpop.f32.mrb[0].mxu0
          %v1376 = vadd.f32 0.0, %v1375
          %v1377 = vpop.f32.mrb[0].mxu0
          %1378 = vmatprep.mubr.f32.mxu0 0.0
          %1379 = vmatmul.mubr.f32.gmra.mrb[0].mxu0 %v1262
          %v1380 = vpop.f32.mrb[0].mxu0
          %v1381 = vadd.f32 0.0, %v1380
          %v1382 = vpop.f32.mrb[0].mxu0
          %1383 = vmatprep.mubr.f32.mxu0 0.0
          %1384 = vmatmul.mubr.f32.gmra.mrb[0].mxu0 %v1263
          %v1385 = vpop.f32.mrb[0].mxu0
          %v1386 = vadd.f32 0.0, %v1385
          %v1387 = vpop.f32.mrb[0].mxu0
          %1388 = vmatprep.mubr.f32.mxu0 0.0
          %1389 = vmatmul.mubr.f32.gmra.mrb[0].mxu0 %v1264
          %v1390 = vpop.f32.mrb[0].mxu0
          %v1391 = vadd.f32 0.0, %v1390
          %v1392 = vpop.f32.mrb[0].mxu0
          %1393 = vmatprep.mubr.f32.mxu0 0.0
          %1394 = vmatmul.mubr.f32.gmra.mrb[0].mxu0 %v1265
          %v1395 = vpop.f32.mrb[0].mxu0
          %v1396 = vadd.f32 0.0, %v1395
          %v1397 = vpop.f32.mrb[0].mxu0
          %1398 = vmatprep.mubr.f32.mxu0 0.0
          %1399 = vmatmul.mubr.f32.gmra.mrb[0].mxu0 %v1266
          %v1400 = vpop.f32.mrb[0].mxu0
          %v1401 = vadd.f32 0.0, %v1400
          %v1402 = vpop.f32.mrb[0].mxu0
          %1403 = vmatprep.mubr.f32.mxu0 0.0
          %1404 = vmatmul.mubr.f32.gmra.mrb[0].mxu0 %v1267
          %v1405 = vpop.f32.mrb[0].mxu0
          %v1406 = vadd.f32 0.0, %v1405
          %v1407 = vpop.f32.mrb[0].mxu0
          %1408 = vmatprep.mubr.f32.mxu0 0.0
          %1409 = vmatmul.mubr.f32.gmra.mrb[0].mxu0 %v1268
          %v1410 = vpop.f32.mrb[0].mxu0
          %v1411 = vadd.f32 0.0, %v1410
          %v1412 = vpop.f32.mrb[0].mxu0
          %1413 = vmatprep.mubr.f32.mxu0 0.0
          %1414 = vmatmul.mubr.f32.gmra.mrb[0].mxu0 %v1269
          %v1415 = vpop.f32.mrb[0].mxu0
          %v1416 = vadd.f32 0.0, %v1415
          %v1417 = vpop.f32.mrb[0].mxu0
          %1418 = vmatprep.mubr.f32.mxu0 0.0
          %1419 = vmatmul.mubr.f32.gmra.mrb[0].mxu0 %v1270
          %v1420 = vpop.f32.mrb[0].mxu0
          %v1421 = vadd.f32 0.0, %v1420
          %v1422 = vpop.f32.mrb[0].mxu0
          %1423 = vmatprep.mubr.f32.mxu0 0.0
          %1424 = vmatmul.mubr.f32.gmra.mrb[0].mxu0 %v1271
          %v1425 = vpop.f32.mrb[0].mxu0
          %v1426 = vadd.f32 0.0, %v1425
          %v1427 = vpop.f32.mrb[0].mxu0
          %1428 = vmatprep.mubr.f32.mxu0 0.0
          %1429 = vmatmul.mubr.f32.gmra.mrb[0].mxu0 %v1272
          %v1430 = vpop.f32.mrb[0].mxu0
          %v1431 = vadd.f32 0.0, %v1430
          %v1432 = vpop.f32.mrb[0].mxu0
          %1433 = vmatprep.mubr.f32.mxu0 0.0
          %1434 = vmatmul.mubr.f32.gmra.mrb[0].mxu0 %v1273
          %v1435 = vpop.f32.mrb[0].mxu0
          %v1436 = vadd.f32 0.0, %v1435
          %v1437 = vpop.f32.mrb[0].mxu0
          %1438 = vmatprep.mubr.f32.mxu0 0.0
          %1439 = vmatmul.mubr.f32.gmra.mrb[0].mxu0 %v1274
          %v1440 = vpop.f32.mrb[0].mxu0
          %v1441 = vadd.f32 0.0, %v1440
          %v1442 = vpop.f32.mrb[0].mxu0
          %1443 = vmatprep.mubr.f32.mxu0 0.0
          %1444 = vmatmul.mubr.f32.gmra.mrb[0].mxu0 %v1275
          %v1445 = vpop.f32.mrb[0].mxu0
          %v1446 = vadd.f32 0.0, %v1445
          %v1447 = vpop.f32.mrb[0].mxu0
          %1448 = vmatprep.mubr.f32.mxu0 0.0
          %1449 = vmatmul.mubr.f32.gmra.mrb[0].mxu0 %v1276
          %v1450 = vpop.f32.mrb[0].mxu0
          %v1451 = vadd.f32 0.0, %v1450
          %v1452 = vpop.f32.mrb[0].mxu0
          %1453 = vmatprep.mubr.f32.mxu0 0.0
          %1454 = vmatmul.mubr.f32.gmra.mrb[0].mxu0 %v1277
          %v1455 = vpop.f32.mrb[0].mxu0
          %v1456 = vadd.f32 0.0, %v1455
          %v1457 = vpop.f32.mrb[0].mxu0
          %1458 = vmatprep.mubr.f32.mxu0 0.0
          %1459 = vmatmul.mubr.f32.gmra.mrb[0].mxu0 %v1278
          %v1460 = vpop.f32.mrb[0].mxu0
          %v1461 = vadd.f32 0.0, %v1460
          %v1462 = vpop.f32.mrb[0].mxu0
          %1463 = vmatprep.mubr.f32.mxu0 0.0
          %1464 = vmatmul.mubr.f32.gmra.mrb[0].mxu0 %v1279
          %v1465 = vpop.f32.mrb[0].mxu0
          %v1466 = vadd.f32 0.0, %v1465
          %v1467 = vpop.f32.mrb[0].mxu0
          %1468 = vmatprep.mubr.f32.mxu0 0.0
          %1469 = vmatmul.mubr.f32.gmra.mrb[0].mxu0 %v1280
          %v1470 = vpop.f32.mrb[0].mxu0
          %v1471 = vadd.f32 0.0, %v1470
          %v1472 = vpop.f32.mrb[0].mxu0
          %1473 = vmatprep.mubr.f32.mxu0 0.0
          %1474 = vmatmul.mubr.f32.gmra.mrb[0].mxu0 %v1281
          %v1475 = vpop.f32.mrb[0].mxu0
          %v1476 = vadd.f32 0.0, %v1475
          %v1477 = vpop.f32.mrb[0].mxu0
          %1478 = vmatprep.mubr.f32.mxu0 0.0
          %1479 = vmatmul.mubr.f32.gmra.mrb[0].mxu0 %v1282
          %v1480 = vpop.f32.mrb[0].mxu0
          %v1481 = vadd.f32 0.0, %v1480
          %v1482 = vpop.f32.mrb[0].mxu0
          %1483 = vmatprep.mubr.f32.mxu0 0.0
          %1484 = vmatmul.mubr.f32.gmra.mrb[0].mxu0 %v1283
          %v1485 = vpop.f32.mrb[0].mxu0
          %v1486 = vadd.f32 0.0, %v1485
          %v1487 = vpop.f32.mrb[0].mxu0
          %1488 = vmatprep.mubr.f32.mxu0 0.0
          %1489 = vmatmul.mubr.f32.gmra.mrb[0].mxu0 %v1284
          %v1490 = vpop.f32.mrb[0].mxu0
          %v1491 = vadd.f32 0.0, %v1490
          %v1492 = vpop.f32.mrb[0].mxu0
          %1493 = vmatprep.mubr.f32.mxu0 0.0
          %1494 = vmatmul.mubr.f32.gmra.mrb[0].mxu0 %v1285
          %v1495 = vpop.f32.mrb[0].mxu0
          %v1496 = vadd.f32 0.0, %v1495
          %v1497 = vpop.f32.mrb[0].mxu0
          %1498 = vmatprep.mubr.f32.mxu0 0.0
          %1499 = vmatmul.mubr.f32.gmra.mrb[0].mxu0 %v1286
          %v1500 = vpop.f32.mrb[0].mxu0
          %v1501 = vadd.f32 0.0, %v1500
          %v1502 = vpop.f32.mrb[0].mxu0
          %1503 = vmatprep.mubr.f32.mxu0 0.0
          %1504 = vmatmul.mubr.f32.gmra.mrb[0].mxu0 %v1287
          %v1505 = vpop.f32.mrb[0].mxu0
          %v1506 = vadd.f32 0.0, %v1505
          %v1507 = vpop.f32.mrb[0].mxu0
          %1508 = vmatprep.mubr.f32.mxu0 0.0
          %1509 = vmatmul.mubr.f32.gmra.mrb[0].mxu0 %v1288
          %v1510 = vpop.f32.mrb[0].mxu0
          %v1511 = vadd.f32 0.0, %v1510
          %v1512 = vpop.f32.mrb[0].mxu0
          %1513 = vmatprep.mubr.f32.mxu0 0.0
          %1514 = vmatmul.mubr.f32.gmra.mrb[0].mxu0 %v1289
          %v1515 = vpop.f32.mrb[0].mxu0
          %v1516 = vadd.f32 0.0, %v1515
          %v1517 = vpop.f32.mrb[0].mxu0
          %1518 = vmatprep.mubr.f32.mxu0 0.0
          %1519 = vmatmul.mubr.f32.gmra.mrb[0].mxu0 %v1290
          %v1520 = vpop.f32.mrb[0].mxu0
          %v1521 = vadd.f32 0.0, %v1520
          %v1522 = vpop.f32.mrb[0].mxu0
          %1523 = vmatprep.mubr.f32.mxu0 0.0
          %1524 = vmatmul.mubr.f32.gmra.mrb[0].mxu0 %v1291
          %v1525 = vpop.f32.mrb[0].mxu0
          %v1526 = vadd.f32 0.0, %v1525
          %v1527 = vpop.f32.mrb[0].mxu0
          %1528 = vmatprep.mubr.f32.mxu0 0.0
          %1529 = vmatmul.mubr.f32.gmra.mrb[0].mxu0 %v1292
          %v1530 = vpop.f32.mrb[0].mxu0
          %v1531 = vadd.f32 0.0, %v1530
          %v1532 = vpop.f32.mrb[0].mxu0
          %1533 = vdwg.mxu0
          %v1534 = vstv %s1129
          %v1535 = vmul.f32 %v1534, %v1376
          %v1536 = vmul.f32 %v1534, %v1381
          %v1537 = vmul.f32 %v1534, %v1386
          %v1538 = vmul.f32 %v1534, %v1391
          %v1539 = vmul.f32 %v1534, %v1396
          %v1540 = vmul.f32 %v1534, %v1401
          %v1541 = vmul.f32 %v1534, %v1406
          %v1542 = vmul.f32 %v1534, %v1411
          %v1543 = vmul.f32 %v1534, %v1416
          %v1544 = vmul.f32 %v1534, %v1421
          %v1545 = vmul.f32 %v1534, %v1426
          %v1546 = vmul.f32 %v1534, %v1431
          %v1547 = vmul.f32 %v1534, %v1436
          %v1548 = vmul.f32 %v1534, %v1441
          %v1549 = vmul.f32 %v1534, %v1446
          %v1550 = vmul.f32 %v1534, %v1451
          %v1551 = vmul.f32 %v1534, %v1456
          %v1552 = vmul.f32 %v1534, %v1461
          %v1553 = vmul.f32 %v1534, %v1466
          %v1554 = vmul.f32 %v1534, %v1471
          %v1555 = vmul.f32 %v1534, %v1476
          %v1556 = vmul.f32 %v1534, %v1481
          %v1557 = vmul.f32 %v1534, %v1486
          %v1558 = vmul.f32 %v1534, %v1491
          %v1559 = vmul.f32 %v1534, %v1496
          %v1560 = vmul.f32 %v1534, %v1501
          %v1561 = vmul.f32 %v1534, %v1506
          %v1562 = vmul.f32 %v1534, %v1511
          %v1563 = vmul.f32 %v1534, %v1516
          %v1564 = vmul.f32 %v1534, %v1521
          %v1565 = vmul.f32 %v1534, %v1526
          %v1566 = vmul.f32 %v1534, %v1531
          %s1567 = ssub.f32 1.0, %s1129
          %v1568 = vstv %s1567
          %v1569 = vmul.f32 %v1568, %v1261
          %v1570 = vmul.f32 %v1568, %v1262
          %v1571 = vmul.f32 %v1568, %v1263
          %v1572 = vmul.f32 %v1568, %v1264
          %v1573 = vmul.f32 %v1568, %v1265
          %v1574 = vmul.f32 %v1568, %v1266
          %v1575 = vmul.f32 %v1568, %v1267
          %v1576 = vmul.f32 %v1568, %v1268
          %v1577 = vmul.f32 %v1568, %v1269
          %v1578 = vmul.f32 %v1568, %v1270
          %v1579 = vmul.f32 %v1568, %v1271
          %v1580 = vmul.f32 %v1568, %v1272
          %v1581 = vmul.f32 %v1568, %v1273
          %v1582 = vmul.f32 %v1568, %v1274
          %v1583 = vmul.f32 %v1568, %v1275
          %v1584 = vmul.f32 %v1568, %v1276
          %v1585 = vmul.f32 %v1568, %v1277
          %v1586 = vmul.f32 %v1568, %v1278
          %v1587 = vmul.f32 %v1568, %v1279
          %v1588 = vmul.f32 %v1568, %v1280
          %v1589 = vmul.f32 %v1568, %v1281
          %v1590 = vmul.f32 %v1568, %v1282
          %v1591 = vmul.f32 %v1568, %v1283
          %v1592 = vmul.f32 %v1568, %v1284
          %v1593 = vmul.f32 %v1568, %v1285
          %v1594 = vmul.f32 %v1568, %v1286
          %v1595 = vmul.f32 %v1568, %v1287
          %v1596 = vmul.f32 %v1568, %v1288
          %v1597 = vmul.f32 %v1568, %v1289
          %v1598 = vmul.f32 %v1568, %v1290
          %v1599 = vmul.f32 %v1568, %v1291
          %v1600 = vmul.f32 %v1568, %v1292
          %v1601 = vadd.f32 %v1535, %v1569
          %v1602 = vadd.f32 %v1536, %v1570
          %v1603 = vadd.f32 %v1537, %v1571
          %v1604 = vadd.f32 %v1538, %v1572
          %v1605 = vadd.f32 %v1539, %v1573
          %v1606 = vadd.f32 %v1540, %v1574
          %v1607 = vadd.f32 %v1541, %v1575
          %v1608 = vadd.f32 %v1542, %v1576
          %v1609 = vadd.f32 %v1543, %v1577
          %v1610 = vadd.f32 %v1544, %v1578
          %v1611 = vadd.f32 %v1545, %v1579
          %v1612 = vadd.f32 %v1546, %v1580
          %v1613 = vadd.f32 %v1547, %v1581
          %v1614 = vadd.f32 %v1548, %v1582
          %v1615 = vadd.f32 %v1549, %v1583
          %v1616 = vadd.f32 %v1550, %v1584
          %v1617 = vadd.f32 %v1551, %v1585
          %v1618 = vadd.f32 %v1552, %v1586
          %v1619 = vadd.f32 %v1553, %v1587
          %v1620 = vadd.f32 %v1554, %v1588
          %v1621 = vadd.f32 %v1555, %v1589
          %v1622 = vadd.f32 %v1556, %v1590
          %v1623 = vadd.f32 %v1557, %v1591
          %v1624 = vadd.f32 %v1558, %v1592
          %v1625 = vadd.f32 %v1559, %v1593
          %v1626 = vadd.f32 %v1560, %v1594
          %v1627 = vadd.f32 %v1561, %v1595
          %v1628 = vadd.f32 %v1562, %v1596
          %v1629 = vadd.f32 %v1563, %v1597
          %v1630 = vadd.f32 %v1564, %v1598
          %v1631 = vadd.f32 %v1565, %v1599
          %v1632 = vadd.f32 %v1566, %v1600
          %1633 = vst [vmem:[%s345] sm:$0xff] %v1601
          %1634 = vst [vmem:[%s345 + $0x8] sm:$0xff] %v1602
          %1635 = vst [vmem:[%s345 + $0x10] sm:$0xff] %v1603
          %1636 = vst [vmem:[%s345 + $0x18] sm:$0xff] %v1604
          %1637 = vst [vmem:[%s345 + $0x20] sm:$0xff] %v1605
          %1638 = vst [vmem:[%s345 + $0x28] sm:$0xff] %v1606
          %1639 = vst [vmem:[%s345 + $0x30] sm:$0xff] %v1607
          %1640 = vst [vmem:[%s345 + $0x38] sm:$0xff] %v1608
          %1641 = vst [vmem:[%s345 + $0x40] sm:$0xff] %v1609
          %1642 = vst [vmem:[%s345 + $0x48] sm:$0xff] %v1610
          %1643 = vst [vmem:[%s345 + $0x50] sm:$0xff] %v1611
          %1644 = vst [vmem:[%s345 + $0x58] sm:$0xff] %v1612
          %1645 = vst [vmem:[%s345 + $0x60] sm:$0xff] %v1613
          %1646 = vst [vmem:[%s345 + $0x68] sm:$0xff] %v1614
          %1647 = vst [vmem:[%s345 + $0x70] sm:$0xff] %v1615
          %1648 = vst [vmem:[%s345 + $0x78] sm:$0xff] %v1616
          %1649 = vst [vmem:[%s345 + $0x80] sm:$0xff] %v1617
          %1650 = vst [vmem:[%s345 + $0x88] sm:$0xff] %v1618
          %1651 = vst [vmem:[%s345 + $0x90] sm:$0xff] %v1619
          %1652 = vst [vmem:[%s345 + $0x98] sm:$0xff] %v1620
          %1653 = vst [vmem:[%s345 + $0xa0] sm:$0xff] %v1621
          %1654 = vst [vmem:[%s345 + $0xa8] sm:$0xff] %v1622
          %1655 = vst [vmem:[%s345 + $0xb0] sm:$0xff] %v1623
          %1656 = vst [vmem:[%s345 + $0xb8] sm:$0xff] %v1624
          %1657 = vst [vmem:[%s345 + $0xc0] sm:$0xff] %v1625
          %1658 = vst [vmem:[%s345 + $0xc8] sm:$0xff] %v1626
          %1659 = vst [vmem:[%s345 + $0xd0] sm:$0xff] %v1627
          %1660 = vst [vmem:[%s345 + $0xd8] sm:$0xff] %v1628
          %1661 = vst [vmem:[%s345 + $0xe0] sm:$0xff] %v1629
          %1662 = vst [vmem:[%s345 + $0xe8] sm:$0xff] %v1630
          %1663 = vst [vmem:[%s345 + $0xf0] sm:$0xff] %v1631
          %1664 = vst [vmem:[%s345 + $0xf8] sm:$0xff] %v1632
        $region68: #{tpu_custom_call.1} parent=39 // pred_fallthru
          _
        %s1665 = sand.u32 %s166, 1
        %s1666 = scalar_lea.sflag [#allocation5], %s1665
        %s1667 = sand.u32 %s166, 1
        %s1668 = smul.addr %s1667, 256
        %s1669 = scalar_lea.vmem [#allocation12], %s1668
        // Predicated region
        $region69: #{tpu_custom_call.1} parent=39 // pred_check
          %p1670 = pneg %p176
        $region70: #{tpu_custom_call.1} parent=39 // pred_check_branch
          %1672 = sbr.rel (%p1670) target = $region72
        $region71: #{tpu_custom_call.1} parent=39 // pred_region
          %s1673 = smul.u32 32, %s28
          %s1675 = ssub.s32 4096, 4096
          %1676 = vsyncadd %s1666, %s1675
          %s1677 = smul.addr %s1673, 128
          %s1678 = scalar_lea.hbm %s5, %s1677
          %s1679 = sshll.u32 %s1669, 4
          %s1680 = int_to_ptr.vmem [resolvable:$true] %s1679
          %1685 = dma.vmem_to_hbm [thread:$0]  %s1680, 4096, %s1678, %s1666, 128, 128, 8
        $region72: #{tpu_custom_call.1} parent=39 // pred_fallthru
          _
      $region40: #{tpu_custom_call.1} parent=5 // pred_fallthru
        _
      %p1686 = scmp.le.s32.totalorder 2, %s19
      // Predicated region
      $region73: #{tpu_custom_call.1} parent=5 // pred_check
        %p1687 = pneg %p1686
      $region74: #{tpu_custom_call.1} parent=5 // pred_check_branch
        %1689 = sbr.rel (%p1687) target = $region76
      $region75: #{tpu_custom_call.1} parent=5 // pred_region
        %s1690 = ssub.s32 %s19, 2
        // Predicated region
        $region77: #{tpu_custom_call.1} parent=75 // pred_check
          %p1691 = pneg %p182
        $region78: #{tpu_custom_call.1} parent=75 // pred_check_branch
          %1693 = sbr.rel (%p1691) target = $region80
        $region79: #{tpu_custom_call.1} parent=75 // pred_region
          %s1694 = sand.u32 %s167, 1
          %s1695 = scalar_lea.sflag [#allocation5], %s1694
          %s1696 = sand.u32 %s167, 1
          %s1697 = smul.addr %s1696, 256
          %s1698 = scalar_lea.vmem [#allocation12], %s1697
          %1699 = dma.done %s1695, 4096
        $region80: #{tpu_custom_call.1} parent=75 // pred_fallthru
          _
      $region76: #{tpu_custom_call.1} parent=5 // pred_fallthru
        _
    $region6: #{tpu_custom_call.1} parent=1 // loop_footer
      %s23 = sadd.s32 1, %s19
    $region7: #{tpu_custom_call.1} parent=1 // loop_footer_branch
      %18 = sbr.rel target = $region3
    $region8: #{tpu_custom_call.1} parent=1 // loop_exit
      _
    %1700 = vsyncpa [#allocation4], 1
    %s1701 = scalar_lea.sflag [#allocation4], 1
    %1702 = vsyncpa %s1701, 1
    %1703 = vsyncpa [#allocation9], 1
    %1704 = vsyncpa [#allocation5], 1
    %s1705 = scalar_lea.sflag [#allocation5], 1
    %1706 = vsyncpa %s1705, 1
    %1707 = vsyncpa [#allocation6], 1
    %s1708 = scalar_lea.sflag [#allocation6], 1
    %1709 = vsyncpa %s1708, 1

</llo_original>
